<compile_context>
chip_gen: v7x
topology: tpu7x:2x2x1
jax: 0.10.0
libtpu: 0.0.40
codegen_flags: <defaults>
</compile_context>

<pallas_src>
import math
import numpy as np
import jax
import jax.numpy as jnp
from jax.experimental import pallas as pl
from jax.experimental.pallas import tpu as pltpu

# ---- small synthetic config (mirrors LunarisCodexConfig fields) ----
VOCAB = 64
D_MODEL = 32
N_HEADS = 4
HEAD_DIM = D_MODEL // N_HEADS
N_LAYERS = 2
ROPE_THETA = 10000.0
DROPOUT = 0.0          # eval / p=0 -> identity
EPS = 1e-5
_h = int(2 * (4 * D_MODEL) / 3)
HIDDEN = 256 * ((_h + 256 - 1) // 256)   # SwiGLU hidden dim (same formula as the module)


def _rmsnorm(x, w):
    # x: (rows, D) f32, w: (1, D) f32
    var = jnp.mean(x * x, axis=-1, keepdims=True)
    return x * jax.lax.rsqrt(var + EPS) * w


# ---------------- fused whole-model kernel: grid = (B, N_LAYERS) ----------------
def model_kernel(x_ref, ln1_ref, wq_ref, wk_ref, wv_ref, wo_ref, ln2_ref,
                 w1_ref, w3_ref, w2_ref, cos_ref, sin_ref, lnf_ref, lmw_ref,
                 logits_ref, state_ref):
    l = pl.program_id(1)

    # initialize the VMEM-resident residual stream at the first layer of this batch element
    @pl.when(l == 0)
    def _():
        state_ref[...] = x_ref[0]

    x = state_ref[...]                      # (T, D) f32
    T, D = x.shape
    hh = HEAD_DIM // 2

    # ---- attention: RMSNorm -> per-head QKV (batched) -> RoPE -> causal softmax -> proj ----
    xn = _rmsnorm(x, ln1_ref[0]).astype(jnp.bfloat16)
    xb = jnp.broadcast_to(xn[None], (N_HEADS, T, D))                 # cheap leading-dim bcast
    proj_dims = (((2,), (1,)), ((0,), (0,)))                         # 'htd,hdk->htk'
    q = jax.lax.dot_general(xb, wq_ref[0], proj_dims, preferred_element_type=jnp.float32)
    k = jax.lax.dot_general(xb, wk_ref[0], proj_dims, preferred_element_type=jnp.float32)
    v = jax.lax.dot_general(xb, wv_ref[0], proj_dims, preferred_element_type=jnp.float32)

    # RoPE, applied once for all heads (columns are already [evens..., odds...] per head)
    cos = cos_ref[...]                       # (T, hd//2) broadcasts over the head axis
    sin = sin_ref[...]
    qe, qo = q[..., :hh], q[..., hh:]
    ke, ko = k[..., :hh], k[..., hh:]
    qr = jnp.concatenate([qe * cos - qo * sin, qe * sin + qo * cos], axis=-1)
    kr = jnp.concatenate([ke * cos - ko * sin, ke * sin + ko * cos], axis=-1)

    row = jax.lax.broadcasted_iota(jnp.int32, (T, T), 0)
    col = jax.lax.broadcasted_iota(jnp.int32, (T, T), 1)
    causal = (row >= col)[None]

    s = jax.lax.dot_general(qr.astype(jnp.bfloat16), kr.astype(jnp.bfloat16),
                            (((2,), (2,)), ((0,), (0,))),            # 'hqd,hkd->hqk'
                            preferred_element_type=jnp.float32)
    s = s * (1.0 / math.sqrt(HEAD_DIM))
    s = jnp.where(causal, s, -jnp.inf)
    m = jnp.max(s, axis=-1, keepdims=True)
    p = jnp.exp(s - m)
    p = p * pl.reciprocal(jnp.sum(p, axis=-1, keepdims=True), approx=True)
    y = jax.lax.dot_general(p.astype(jnp.bfloat16), v.astype(jnp.bfloat16),
                            (((2,), (1,)), ((0,), (0,))),            # 'hqk,hkd->hqd'
                            preferred_element_type=jnp.float32)
    # per-head output projection + sum over heads == concat(heads) @ Wproj
    attn = jax.lax.dot_general(y.astype(jnp.bfloat16), wo_ref[0],
                               (((2,), (1,)), ((0,), (0,))),         # 'hqd,hdD->hqD'
                               preferred_element_type=jnp.float32)
    x = x + jnp.sum(attn, axis=0)

    # ---- MLP (SwiGLU) -> residual ----
    xn2 = _rmsnorm(x, ln2_ref[0]).astype(jnp.bfloat16)
    h1 = jnp.dot(xn2, w1_ref[0], preferred_element_type=jnp.float32)
    h3 = jnp.dot(xn2, w3_ref[0], preferred_element_type=jnp.float32)
    g = (h1 * jax.nn.sigmoid(h1) * h3).astype(jnp.bfloat16)
    x = x + jnp.dot(g, w2_ref[0], preferred_element_type=jnp.float32)

    state_ref[...] = x

    # ---- final RMSNorm + lm_head on the last token, fused into the last layer step ----
    @pl.when(l == pl.num_programs(1) - 1)
    def _():
        xl = x[T - 1:, :]                                            # (1, D), already in VMEM
        xn_f = _rmsnorm(xl, lnf_ref[...]).astype(jnp.bfloat16)
        logits_ref[0] = jnp.dot(xn_f, lmw_ref[...], preferred_element_type=jnp.float32)


def run_model(x, stacked, cos, sin, lnf, lm_w):
    B, T, D = x.shape
    L = stacked["ln1"].shape[0]
    V = lm_w.shape[1]

    def layer_spec(shape):
        n_trailing = len(shape) - 1
        return pl.BlockSpec((1,) + tuple(shape[1:]),
                            lambda b, l, _n=n_trailing: (l,) + (0,) * _n)

    def full_spec(shape):
        return pl.BlockSpec(tuple(shape), lambda b, l, _n=len(shape): (0,) * _n)

    return pl.pallas_call(
        model_kernel,
        out_shape=jax.ShapeDtypeStruct((B, 1, V), jnp.float32),
        grid=(B, L),
        in_specs=[
            pl.BlockSpec((1, T, D), lambda b, l: (b, 0, 0)),
            layer_spec(stacked["ln1"].shape),
            layer_spec(stacked["wq"].shape),
            layer_spec(stacked["wk"].shape),
            layer_spec(stacked["wv"].shape),
            layer_spec(stacked["wo"].shape),
            layer_spec(stacked["ln2"].shape),
            layer_spec(stacked["w1"].shape),
            layer_spec(stacked["w3"].shape),
            layer_spec(stacked["w2"].shape),
            full_spec(cos.shape), full_spec(sin.shape),
            full_spec(lnf.shape), full_spec(lm_w.shape),
        ],
        out_specs=pl.BlockSpec((1, 1, V), lambda b, l: (b, 0, 0)),
        scratch_shapes=[pltpu.VMEM((T, D), jnp.float32)],
        compiler_params=pltpu.CompilerParams(
            dimension_semantics=("parallel", "arbitrary")),
    )(x, stacked["ln1"], stacked["wq"], stacked["wk"], stacked["wv"],
      stacked["wo"], stacked["ln2"], stacked["w1"], stacked["w3"],
      stacked["w2"], cos, sin, lnf, lm_w)


# ---------------- pure-JAX reference (mirrors the PyTorch module) ----------------
def _ref_rmsnorm(x, w):
    var = jnp.mean(x.astype(jnp.float32) ** 2, axis=-1, keepdims=True)
    return (x.astype(jnp.float32) * jax.lax.rsqrt(var + EPS)) * w


def ref_forward(idx, wte, layers_pt, lnf, cos, sin):
    B, T = idx.shape
    x = wte[idx]
    for (ln1, c_attn, c_proj, ln2, w1, w3, w2) in layers_pt:
        xn = _ref_rmsnorm(x, ln1)
        qkv = xn @ c_attn.T
        q, k, v = jnp.split(qkv, 3, axis=-1)

        def heads(a):
            return a.reshape(B, T, N_HEADS, HEAD_DIM).transpose(0, 2, 1, 3)

        q, k, v = heads(q), heads(k), heads(v)

        def rope(a):
            ae, ao = a[..., 0::2], a[..., 1::2]
            c, s = cos[None, None], sin[None, None]
            return jnp.stack([ae * c - ao * s, ae * s + ao * c], axis=-1).reshape(a.shape)

        q, k = rope(q), rope(k)
        att = jnp.einsum("bhqd,bhkd->bhqk", q, k) / math.sqrt(HEAD_DIM)
        mask = np.tril(np.ones((T, T), dtype=bool))
        att = jnp.where(mask[None, None], att, -jnp.inf)
        att = jax.nn.softmax(att, axis=-1)
        y = jnp.einsum("bhqk,bhkd->bhqd", att, v)
        y = y.transpose(0, 2, 1, 3).reshape(B, T, D_MODEL)
        x = x + y @ c_proj.T
        xn2 = _ref_rmsnorm(x, ln2)
        x = x + (jax.nn.silu(xn2 @ w1.T) * (xn2 @ w3.T)) @ w2.T
    x = _ref_rmsnorm(x, lnf)
    return x[:, -1:, :] @ wte.T


if __name__ == "__main__":
    B, T = 2, 8

    key = jax.random.PRNGKey(0)
    kidx, kwte, *lkeys = jax.random.split(key, 2 + 5 * N_LAYERS)
    idx = jax.random.randint(kidx, (B, T), 0, VOCAB, dtype=jnp.int32)

    std = 0.02 / math.sqrt(2 * N_LAYERS)
    wte = (0.02 * jax.random.normal(kwte, (VOCAB, D_MODEL))).astype(jnp.float32)

    layers_pt = []
    for l in range(N_LAYERS):
        ks = lkeys[5 * l:5 * (l + 1)]
        c_attn = (std * jax.random.normal(ks[0], (3 * D_MODEL, D_MODEL))).astype(jnp.float32)
        c_proj = (std * jax.random.normal(ks[1], (D_MODEL, D_MODEL))).astype(jnp.float32)
        w1 = (0.02 * jax.random.normal(ks[2], (HIDDEN, D_MODEL))).astype(jnp.float32)
        w3 = (0.02 * jax.random.normal(ks[3], (HIDDEN, D_MODEL))).astype(jnp.float32)
        w2 = (std * jax.random.normal(ks[4], (D_MODEL, HIDDEN))).astype(jnp.float32)
        ln1 = jnp.ones((1, D_MODEL), jnp.float32)
        ln2 = jnp.ones((1, D_MODEL), jnp.float32)
        layers_pt.append((ln1, c_attn, c_proj, ln2, w1, w3, w2))
    lnf = jnp.ones((1, D_MODEL), jnp.float32)

    # RoPE tables (same as precompute_freqs_cis, split into cos/sin), shape (T, HEAD_DIM//2)
    inv = 1.0 / (ROPE_THETA ** (np.arange(0, HEAD_DIM, 2)[: HEAD_DIM // 2].astype(np.float32) / HEAD_DIM))
    ang = np.outer(np.arange(T, dtype=np.float32), inv)
    cos = jnp.asarray(np.cos(ang), jnp.float32)
    sin = jnp.asarray(np.sin(ang), jnp.float32)

    # ---- kernel-layout weights: per-head stacks, bf16, stacked over layers ----
    def head_split(w_cols, deinterleave):
        # w_cols: (D, D) columns in PyTorch head-major natural order
        parts = []
        for h in range(N_HEADS):
            blk = w_cols[:, h * HEAD_DIM:(h + 1) * HEAD_DIM]
            if deinterleave:                       # [even dims..., odd dims...] per head
                blk = jnp.concatenate([blk[:, 0::2], blk[:, 1::2]], axis=1)
            parts.append(blk)
        return jnp.stack(parts, axis=0)            # (H, D, hd)

    per_layer = {k: [] for k in ["ln1", "wq", "wk", "wv", "wo", "ln2", "w1", "w3", "w2"]}
    for (ln1, c_attn, c_proj, ln2, w1, w3, w2) in layers_pt:
        wt = c_attn.T                              # (D, 3D)
        per_layer["ln1"].append(ln1)
        per_layer["wq"].append(head_split(wt[:, :D_MODEL], True).astype(jnp.bfloat16))
        per_layer["wk"].append(head_split(wt[:, D_MODEL:2 * D_MODEL], True).astype(jnp.bfloat16))
        per_layer["wv"].append(head_split(wt[:, 2 * D_MODEL:], False).astype(jnp.bfloat16))
        wo_t = c_proj.T                            # (D, D); rows = head-major input dims
        per_layer["wo"].append(jnp.stack(
            [wo_t[h * HEAD_DIM:(h + 1) * HEAD_DIM, :] for h in range(N_HEADS)],
            axis=0).astype(jnp.bfloat16))          # (H, hd, D)
        per_layer["ln2"].append(ln2)
        per_layer["w1"].append(w1.T.astype(jnp.bfloat16))
        per_layer["w3"].append(w3.T.astype(jnp.bfloat16))
        per_layer["w2"].append(w2.T.astype(jnp.bfloat16))
    stacked = {k: jnp.stack(v, axis=0) for k, v in per_layer.items()}

    # ---- forward pass ----
    # TODO(synk): token-embedding gather is data-dependent; kept in plain JAX (dropout p=0 is identity).
    x = wte[idx]                                   # (B, T, D) f32
    logits = run_model(x, stacked, cos, sin, lnf, wte.T.astype(jnp.bfloat16))   # (B, 1, V)
    logits = jax.block_until_ready(logits)

    ref = ref_forward(idx, wte, layers_pt, lnf, cos, sin)
    np.testing.assert_allclose(np.asarray(logits), np.asarray(ref), rtol=0, atol=1e-2)
    print("KERNEL_OK")
</pallas_src>

<mosaic_0001>
module attributes {stable_mosaic.version = 11 : i64} {
  func.func @model_kernel(%arg0: i32, %arg1: i32, %arg2: memref<1x8x32xf32, #tpu.memory_space<vmem>>, %arg3: memref<1x1x32xf32, #tpu.memory_space<vmem>>, %arg4: memref<1x4x32x8xbf16, #tpu.memory_space<vmem>>, %arg5: memref<1x4x32x8xbf16, #tpu.memory_space<vmem>>, %arg6: memref<1x4x32x8xbf16, #tpu.memory_space<vmem>>, %arg7: memref<1x4x8x32xbf16, #tpu.memory_space<vmem>>, %arg8: memref<1x1x32xf32, #tpu.memory_space<vmem>>, %arg9: memref<1x32x256xbf16, #tpu.memory_space<vmem>>, %arg10: memref<1x32x256xbf16, #tpu.memory_space<vmem>>, %arg11: memref<1x256x32xbf16, #tpu.memory_space<vmem>>, %arg12: memref<8x4xf32, #tpu.memory_space<vmem>>, %arg13: memref<8x4xf32, #tpu.memory_space<vmem>>, %arg14: memref<1x32xf32, #tpu.memory_space<vmem>>, %arg15: memref<32x64xbf16, #tpu.memory_space<vmem>>, %arg16: memref<1x1x64xf32, #tpu.memory_space<vmem>>, %arg17: memref<8x32xf32, #tpu.memory_space<vmem>>) attributes {dimension_semantics = [#tpu.dimension_semantics<parallel>, #tpu.dimension_semantics<arbitrary>], iteration_bounds = array<i64: 2, 2>, scalar_prefetch = 0 : i64, scratch_operands = 1 : i64, tpu.core_type = #tpu.core_type<tc>, window_params = [{transform_indices = @transform_0, window_bounds = array<i64: 1, 8, 32>}, {transform_indices = @transform_1, window_bounds = array<i64: 1, 1, 32>}, {transform_indices = @transform_2, window_bounds = array<i64: 1, 4, 32, 8>}, {transform_indices = @transform_3, window_bounds = array<i64: 1, 4, 32, 8>}, {transform_indices = @transform_4, window_bounds = array<i64: 1, 4, 32, 8>}, {transform_indices = @transform_5, window_bounds = array<i64: 1, 4, 8, 32>}, {transform_indices = @transform_6, window_bounds = array<i64: 1, 1, 32>}, {transform_indices = @transform_7, window_bounds = array<i64: 1, 32, 256>}, {transform_indices = @transform_8, window_bounds = array<i64: 1, 32, 256>}, {transform_indices = @transform_9, window_bounds = array<i64: 1, 256, 32>}, {pipeline_mode = #tpu.pipeline_mode<synchronous>, transform_indices = @transform_10, window_bounds = array<i64: 8, 4>}, {pipeline_mode = #tpu.pipeline_mode<synchronous>, transform_indices = @transform_11, window_bounds = array<i64: 8, 4>}, {pipeline_mode = #tpu.pipeline_mode<synchronous>, transform_indices = @transform_12, window_bounds = array<i64: 1, 32>}, {pipeline_mode = #tpu.pipeline_mode<synchronous>, transform_indices = @transform_13, window_bounds = array<i64: 32, 64>}, {transform_indices = @transform_14, window_bounds = array<i64: 1, 1, 64>}]} {
    %c0_i32 = arith.constant 0 : i32
    %0 = arith.cmpi eq, %arg1, %c0_i32 : i32
    %1 = arith.extui %0 : i1 to i32
    %c0_i32_0 = arith.constant 0 : i32
    %2 = arith.cmpi ne, %1, %c0_i32_0 : i32
    scf.if %2 {
      %c0_60 = arith.constant 0 : index
      %c0_61 = arith.constant 0 : index
      %c0_62 = arith.constant 0 : index
      %136 = vector.load %arg2[%c0_60, %c0_61, %c0_62] : memref<1x8x32xf32, #tpu.memory_space<vmem>>, vector<1x8x32xf32>
      %137 = vector.shape_cast %136 : vector<1x8x32xf32> to vector<8x32xf32>
      %c0_63 = arith.constant 0 : index
      %c0_64 = arith.constant 0 : index
      %138 = vector.load %arg17[%c0_63, %c0_64] : memref<8x32xf32, #tpu.memory_space<vmem>>, vector<8x32xf32>
      tpu.vector_store %arg17[%c0_63, %c0_64], %137 {strides = array<i32>} : memref<8x32xf32, #tpu.memory_space<vmem>>, vector<8x32xf32>,
    } else {
    }
    %c0 = arith.constant 0 : index
    %c0_1 = arith.constant 0 : index
    %3 = vector.load %arg17[%c0, %c0_1] : memref<8x32xf32, #tpu.memory_space<vmem>>, vector<8x32xf32>
    %c0_2 = arith.constant 0 : index
    %c0_3 = arith.constant 0 : index
    %c0_4 = arith.constant 0 : index
    %4 = vector.load %arg3[%c0_2, %c0_3, %c0_4] : memref<1x1x32xf32, #tpu.memory_space<vmem>>, vector<1x1x32xf32>
    %5 = vector.shape_cast %4 : vector<1x1x32xf32> to vector<1x32xf32>
    %6 = arith.mulf %3, %3 : vector<8x32xf32>
    %cst = arith.constant dense<0.000000e+00> : vector<8xf32>
    %7 = vector.multi_reduction <add>, %6, %cst [1] : vector<8x32xf32> to vector<8xf32>
    %8 = vector.shape_cast %7 : vector<8xf32> to vector<8x1xf32>
    %cst_5 = arith.constant 3.200000e+01 : f32
    %9 = vector.broadcast %cst_5 : f32 to vector<8x1xf32>
    %10 = arith.divf %8, %9 : vector<8x1xf32>
    %cst_6 = arith.constant 9.99999974E-6 : f32
    %11 = vector.broadcast %cst_6 : f32 to vector<8x1xf32>
    %12 = arith.addf %10, %11 : vector<8x1xf32>
    %13 = math.rsqrt %12 : vector<8x1xf32>
    %14 = vector.broadcast %13 : vector<8x1xf32> to vector<8x32xf32>
    %15 = arith.mulf %3, %14 : vector<8x32xf32>
    %16 = vector.broadcast %5 : vector<1x32xf32> to vector<8x32xf32>
    %17 = arith.mulf %15, %16 : vector<8x32xf32>
    %18 = arith.truncf %17 : vector<8x32xf32> to vector<8x32xbf16>
    %19 = vector.shape_cast %18 : vector<8x32xbf16> to vector<1x8x32xbf16>
    %20 = vector.shape_cast %19 : vector<1x8x32xbf16> to vector<1x8x32xbf16>
    %21 = vector.broadcast %20 : vector<1x8x32xbf16> to vector<4x8x32xbf16>
    %c0_7 = arith.constant 0 : index
    %c0_8 = arith.constant 0 : index
    %c0_9 = arith.constant 0 : index
    %c0_10 = arith.constant 0 : index
    %22 = vector.load %arg4[%c0_7, %c0_8, %c0_9, %c0_10] : memref<1x4x32x8xbf16, #tpu.memory_space<vmem>>, vector<1x4x32x8xbf16>
    %23 = vector.shape_cast %22 : vector<1x4x32x8xbf16> to vector<4x32x8xbf16>
    %cst_11 = arith.constant dense<0.000000e+00> : vector<4x8x8xf32>
    %24 = tpu.matmul %21, %23, %cst_11 {dimension_numbers = #tpu.dot_dimension_numbers<[2], [1], [1], [2], [0, 0, 0, 1, 1, 2], [0], [0]>} : vector<4x8x32xbf16>, vector<4x32x8xbf16>, vector<4x8x8xf32> -> vector<4x8x8xf32>
    %c0_12 = arith.constant 0 : index
    %c0_13 = arith.constant 0 : index
    %c0_14 = arith.constant 0 : index
    %c0_15 = arith.constant 0 : index
    %25 = vector.load %arg5[%c0_12, %c0_13, %c0_14, %c0_15] : memref<1x4x32x8xbf16, #tpu.memory_space<vmem>>, vector<1x4x32x8xbf16>
    %26 = vector.shape_cast %25 : vector<1x4x32x8xbf16> to vector<4x32x8xbf16>
    %cst_16 = arith.constant dense<0.000000e+00> : vector<4x8x8xf32>
    %27 = tpu.matmul %21, %26, %cst_16 {dimension_numbers = #tpu.dot_dimension_numbers<[2], [1], [1], [2], [0, 0, 0, 1, 1, 2], [0], [0]>} : vector<4x8x32xbf16>, vector<4x32x8xbf16>, vector<4x8x8xf32> -> vector<4x8x8xf32>
    %c0_17 = arith.constant 0 : index
    %c0_18 = arith.constant 0 : index
    %c0_19 = arith.constant 0 : index
    %c0_20 = arith.constant 0 : index
    %28 = vector.load %arg6[%c0_17, %c0_18, %c0_19, %c0_20] : memref<1x4x32x8xbf16, #tpu.memory_space<vmem>>, vector<1x4x32x8xbf16>
    %29 = vector.shape_cast %28 : vector<1x4x32x8xbf16> to vector<4x32x8xbf16>
    %cst_21 = arith.constant dense<0.000000e+00> : vector<4x8x8xf32>
    %30 = tpu.matmul %21, %29, %cst_21 {dimension_numbers = #tpu.dot_dimension_numbers<[2], [1], [1], [2], [0, 0, 0, 1, 1, 2], [0], [0]>} : vector<4x8x32xbf16>, vector<4x32x8xbf16>, vector<4x8x8xf32> -> vector<4x8x8xf32>
    %c0_22 = arith.constant 0 : index
    %c0_23 = arith.constant 0 : index
    %31 = vector.load %arg12[%c0_22, %c0_23] : memref<8x4xf32, #tpu.memory_space<vmem>>, vector<8x4xf32>
    %c0_24 = arith.constant 0 : index
    %c0_25 = arith.constant 0 : index
    %32 = vector.load %arg13[%c0_24, %c0_25] : memref<8x4xf32, #tpu.memory_space<vmem>>, vector<8x4xf32>
    %33 = vector.extract_strided_slice %24 {offsets = [0, 0, 0], sizes = [4, 8, 4], strides = [1, 1, 1]} : vector<4x8x8xf32> to vector<4x8x4xf32>
    %34 = vector.extract_strided_slice %24 {offsets = [0, 0, 4], sizes = [4, 8, 4], strides = [1, 1, 1]} : vector<4x8x8xf32> to vector<4x8x4xf32>
    %35 = vector.extract_strided_slice %27 {offsets = [0, 0, 0], sizes = [4, 8, 4], strides = [1, 1, 1]} : vector<4x8x8xf32> to vector<4x8x4xf32>
    %36 = vector.extract_strided_slice %27 {offsets = [0, 0, 4], sizes = [4, 8, 4], strides = [1, 1, 1]} : vector<4x8x8xf32> to vector<4x8x4xf32>
    %37 = vector.shape_cast %31 : vector<8x4xf32> to vector<1x8x4xf32>
    %38 = vector.broadcast %37 : vector<1x8x4xf32> to vector<4x8x4xf32>
    %39 = arith.mulf %33, %38 : vector<4x8x4xf32>
    %40 = vector.shape_cast %32 : vector<8x4xf32> to vector<1x8x4xf32>
    %41 = vector.broadcast %40 : vector<1x8x4xf32> to vector<4x8x4xf32>
    %42 = arith.mulf %34, %41 : vector<4x8x4xf32>
    %43 = arith.subf %39, %42 : vector<4x8x4xf32>
    %44 = vector.shape_cast %32 : vector<8x4xf32> to vector<1x8x4xf32>
    %45 = vector.broadcast %44 : vector<1x8x4xf32> to vector<4x8x4xf32>
    %46 = arith.mulf %33, %45 : vector<4x8x4xf32>
    %47 = vector.shape_cast %31 : vector<8x4xf32> to vector<1x8x4xf32>
    %48 = vector.broadcast %47 : vector<1x8x4xf32> to vector<4x8x4xf32>
    %49 = arith.mulf %34, %48 : vector<4x8x4xf32>
    %50 = arith.addf %46, %49 : vector<4x8x4xf32>
    %51 = tpu.concatenate %43, %50 in 2 : vector<4x8x4xf32>, vector<4x8x4xf32> -> vector<4x8x8xf32>
    %52 = vector.shape_cast %31 : vector<8x4xf32> to vector<1x8x4xf32>
    %53 = vector.broadcast %52 : vector<1x8x4xf32> to vector<4x8x4xf32>
    %54 = arith.mulf %35, %53 : vector<4x8x4xf32>
    %55 = vector.shape_cast %32 : vector<8x4xf32> to vector<1x8x4xf32>
    %56 = vector.broadcast %55 : vector<1x8x4xf32> to vector<4x8x4xf32>
    %57 = arith.mulf %36, %56 : vector<4x8x4xf32>
    %58 = arith.subf %54, %57 : vector<4x8x4xf32>
    %59 = vector.shape_cast %32 : vector<8x4xf32> to vector<1x8x4xf32>
    %60 = vector.broadcast %59 : vector<1x8x4xf32> to vector<4x8x4xf32>
    %61 = arith.mulf %35, %60 : vector<4x8x4xf32>
    %62 = vector.shape_cast %31 : vector<8x4xf32> to vector<1x8x4xf32>
    %63 = vector.broadcast %62 : vector<1x8x4xf32> to vector<4x8x4xf32>
    %64 = arith.mulf %36, %63 : vector<4x8x4xf32>
    %65 = arith.addf %61, %64 : vector<4x8x4xf32>
    %66 = tpu.concatenate %58, %65 in 2 : vector<4x8x4xf32>, vector<4x8x4xf32> -> vector<4x8x8xf32>
    %67 = tpu.iota {dimensions = array<i32: 0>} : vector<8x8xi32>
    %68 = tpu.iota {dimensions = array<i32: 1>} : vector<8x8xi32>
    %69 = arith.cmpi sge, %67, %68 : vector<8x8xi32>
    %70 = vector.shape_cast %69 : vector<8x8xi1> to vector<1x8x8xi1>
    %71 = arith.truncf %51 : vector<4x8x8xf32> to vector<4x8x8xbf16>
    %72 = arith.truncf %66 : vector<4x8x8xf32> to vector<4x8x8xbf16>
    %cst_26 = arith.constant dense<0.000000e+00> : vector<4x8x8xf32>
    %73 = tpu.matmul %71, %72, %cst_26 {dimension_numbers = #tpu.dot_dimension_numbers<[2], [2], [1], [1], [0, 0, 0, 1, 1, 1], [0], [0]>} : vector<4x8x8xbf16>, vector<4x8x8xbf16>, vector<4x8x8xf32> -> vector<4x8x8xf32>
    %cst_27 = arith.constant 0.353553385 : f32
    %74 = vector.broadcast %cst_27 : f32 to vector<4x8x8xf32>
    %75 = arith.mulf %73, %74 : vector<4x8x8xf32>
    %cst_28 = arith.constant 0xFF800000 : f32
    %76 = vector.shape_cast %70 : vector<1x8x8xi1> to vector<1x8x8xi1>
    %77 = vector.broadcast %76 : vector<1x8x8xi1> to vector<4x8x8xi1>
    %78 = vector.broadcast %cst_28 : f32 to vector<4x8x8xf32>
    %79 = arith.select %77, %75, %78 : vector<4x8x8xi1>, vector<4x8x8xf32>
    %cst_29 = arith.constant dense<0xFF800000> : vector<4x8xf32>
    %80 = vector.multi_reduction <maximumf>, %79, %cst_29 [2] : vector<4x8x8xf32> to vector<4x8xf32>
    %81 = vector.shape_cast %80 : vector<4x8xf32> to vector<4x8x1xf32>
    %82 = vector.broadcast %81 : vector<4x8x1xf32> to vector<4x8x8xf32>
    %83 = arith.subf %79, %82 : vector<4x8x8xf32>
    %84 = math.exp %83 : vector<4x8x8xf32>
    %cst_30 = arith.constant dense<0.000000e+00> : vector<4x8xf32>
    %85 = vector.multi_reduction <add>, %84, %cst_30 [2] : vector<4x8x8xf32> to vector<4x8xf32>
    %86 = vector.shape_cast %85 : vector<4x8xf32> to vector<4x8x1xf32>
    %87 = tpu.reciprocal %86 {approx = true} : vector<4x8x1xf32> -> vector<4x8x1xf32>
    %88 = vector.broadcast %87 : vector<4x8x1xf32> to vector<4x8x8xf32>
    %89 = arith.mulf %84, %88 : vector<4x8x8xf32>
    %90 = arith.truncf %89 : vector<4x8x8xf32> to vector<4x8x8xbf16>
    %91 = arith.truncf %30 : vector<4x8x8xf32> to vector<4x8x8xbf16>
    %cst_31 = arith.constant dense<0.000000e+00> : vector<4x8x8xf32>
    %92 = tpu.matmul %90, %91, %cst_31 {dimension_numbers = #tpu.dot_dimension_numbers<[2], [1], [1], [2], [0, 0, 0, 1, 1, 2], [0], [0]>} : vector<4x8x8xbf16>, vector<4x8x8xbf16>, vector<4x8x8xf32> -> vector<4x8x8xf32>
    %93 = arith.truncf %92 : vector<4x8x8xf32> to vector<4x8x8xbf16>
    %c0_32 = arith.constant 0 : index
    %c0_33 = arith.constant 0 : index
    %c0_34 = arith.constant 0 : index
    %c0_35 = arith.constant 0 : index
    %94 = vector.load %arg7[%c0_32, %c0_33, %c0_34, %c0_35] : memref<1x4x8x32xbf16, #tpu.memory_space<vmem>>, vector<1x4x8x32xbf16>
    %95 = vector.shape_cast %94 : vector<1x4x8x32xbf16> to vector<4x8x32xbf16>
    %cst_36 = arith.constant dense<0.000000e+00> : vector<4x8x32xf32>
    %96 = tpu.matmul %93, %95, %cst_36 {dimension_numbers = #tpu.dot_dimension_numbers<[2], [1], [1], [2], [0, 0, 0, 1, 1, 2], [0], [0]>} : vector<4x8x8xbf16>, vector<4x8x32xbf16>, vector<4x8x32xf32> -> vector<4x8x32xf32>
    %cst_37 = arith.constant dense<0.000000e+00> : vector<8x32xf32>
    %97 = vector.multi_reduction <add>, %96, %cst_37 [0] : vector<4x8x32xf32> to vector<8x32xf32>
    %98 = arith.addf %3, %97 : vector<8x32xf32>
    %c0_38 = arith.constant 0 : index
    %c0_39 = arith.constant 0 : index
    %c0_40 = arith.constant 0 : index
    %99 = vector.load %arg8[%c0_38, %c0_39, %c0_40] : memref<1x1x32xf32, #tpu.memory_space<vmem>>, vector<1x1x32xf32>
    %100 = vector.shape_cast %99 : vector<1x1x32xf32> to vector<1x32xf32>
    %101 = arith.mulf %98, %98 : vector<8x32xf32>
    %cst_41 = arith.constant dense<0.000000e+00> : vector<8xf32>
    %102 = vector.multi_reduction <add>, %101, %cst_41 [1] : vector<8x32xf32> to vector<8xf32>
    %103 = vector.shape_cast %102 : vector<8xf32> to vector<8x1xf32>
    %cst_42 = arith.constant 3.200000e+01 : f32
    %104 = vector.broadcast %cst_42 : f32 to vector<8x1xf32>
    %105 = arith.divf %103, %104 : vector<8x1xf32>
    %cst_43 = arith.constant 9.99999974E-6 : f32
    %106 = vector.broadcast %cst_43 : f32 to vector<8x1xf32>
    %107 = arith.addf %105, %106 : vector<8x1xf32>
    %108 = math.rsqrt %107 : vector<8x1xf32>
    %109 = vector.broadcast %108 : vector<8x1xf32> to vector<8x32xf32>
    %110 = arith.mulf %98, %109 : vector<8x32xf32>
    %111 = vector.broadcast %100 : vector<1x32xf32> to vector<8x32xf32>
    %112 = arith.mulf %110, %111 : vector<8x32xf32>
    %113 = arith.truncf %112 : vector<8x32xf32> to vector<8x32xbf16>
    %c0_44 = arith.constant 0 : index
    %c0_45 = arith.constant 0 : index
    %c0_46 = arith.constant 0 : index
    %114 = vector.load %arg9[%c0_44, %c0_45, %c0_46] : memref<1x32x256xbf16, #tpu.memory_space<vmem>>, vector<1x32x256xbf16>
    %115 = vector.shape_cast %114 : vector<1x32x256xbf16> to vector<32x256xbf16>
    %cst_47 = arith.constant dense<0.000000e+00> : vector<8x256xf32>
    %116 = tpu.matmul %113, %115, %cst_47 {dimension_numbers = #tpu.dot_dimension_numbers<[1], [0], [0], [1], [0, 0, 1, 1], [], []>} : vector<8x32xbf16>, vector<32x256xbf16>, vector<8x256xf32> -> vector<8x256xf32>
    %c0_48 = arith.constant 0 : index
    %c0_49 = arith.constant 0 : index
    %c0_50 = arith.constant 0 : index
    %117 = vector.load %arg10[%c0_48, %c0_49, %c0_50] : memref<1x32x256xbf16, #tpu.memory_space<vmem>>, vector<1x32x256xbf16>
    %118 = vector.shape_cast %117 : vector<1x32x256xbf16> to vector<32x256xbf16>
    %cst_51 = arith.constant dense<0.000000e+00> : vector<8x256xf32>
    %119 = tpu.matmul %113, %118, %cst_51 {dimension_numbers = #tpu.dot_dimension_numbers<[1], [0], [0], [1], [0, 0, 1, 1], [], []>} : vector<8x32xbf16>, vector<32x256xbf16>, vector<8x256xf32> -> vector<8x256xf32>
    %120 = arith.negf %116 : vector<8x256xf32>
    %121 = math.exp %120 : vector<8x256xf32>
    %cst_52 = arith.constant 1.000000e+00 : f32
    %122 = vector.broadcast %cst_52 : f32 to vector<8x256xf32>
    %123 = arith.addf %122, %121 : vector<8x256xf32>
    %124 = arith.divf %122, %123 : vector<8x256xf32>
    %125 = arith.mulf %116, %124 : vector<8x256xf32>
    %126 = arith.mulf %125, %119 : vector<8x256xf32>
    %127 = arith.truncf %126 : vector<8x256xf32> to vector<8x256xbf16>
    %c0_53 = arith.constant 0 : index
    %c0_54 = arith.constant 0 : index
    %c0_55 = arith.constant 0 : index
    %128 = vector.load %arg11[%c0_53, %c0_54, %c0_55] : memref<1x256x32xbf16, #tpu.memory_space<vmem>>, vector<1x256x32xbf16>
    %129 = vector.shape_cast %128 : vector<1x256x32xbf16> to vector<256x32xbf16>
    %cst_56 = arith.constant dense<0.000000e+00> : vector<8x32xf32>
    %130 = tpu.matmul %127, %129, %cst_56 {dimension_numbers = #tpu.dot_dimension_numbers<[1], [0], [0], [1], [0, 0, 1, 1], [], []>} : vector<8x256xbf16>, vector<256x32xbf16>, vector<8x32xf32> -> vector<8x32xf32>
    %131 = arith.addf %98, %130 : vector<8x32xf32>
    %c0_57 = arith.constant 0 : index
    %c0_58 = arith.constant 0 : index
    %132 = vector.load %arg17[%c0_57, %c0_58] : memref<8x32xf32, #tpu.memory_space<vmem>>, vector<8x32xf32>
    tpu.vector_store %arg17[%c0_57, %c0_58], %131 {strides = array<i32>} : memref<8x32xf32, #tpu.memory_space<vmem>>, vector<8x32xf32>,
    %c1_i32 = arith.constant 1 : i32
    %133 = arith.cmpi eq, %arg1, %c1_i32 : i32
    %134 = arith.extui %133 : i1 to i32
    %c0_i32_59 = arith.constant 0 : i32
    %135 = arith.cmpi ne, %134, %c0_i32_59 : i32
    scf.if %135 {
      %136 = vector.extract_strided_slice %131 {offsets = [7, 0], sizes = [1, 32], strides = [1, 1]} : vector<8x32xf32> to vector<1x32xf32>
      %c0_60 = arith.constant 0 : index
      %c0_61 = arith.constant 0 : index
      %137 = vector.load %arg14[%c0_60, %c0_61] : memref<1x32xf32, #tpu.memory_space<vmem>>, vector<1x32xf32>
      %138 = arith.mulf %136, %136 : vector<1x32xf32>
      %cst_62 = arith.constant dense<0.000000e+00> : vector<1xf32>
      %139 = vector.multi_reduction <add>, %138, %cst_62 [1] : vector<1x32xf32> to vector<1xf32>
      %140 = vector.shape_cast %139 : vector<1xf32> to vector<1x1xf32>
      %cst_63 = arith.constant 3.200000e+01 : f32
      %141 = vector.broadcast %cst_63 : f32 to vector<1x1xf32>
      %142 = arith.divf %140, %141 : vector<1x1xf32>
      %cst_64 = arith.constant 9.99999974E-6 : f32
      %143 = vector.broadcast %cst_64 : f32 to vector<1x1xf32>
      %144 = arith.addf %142, %143 : vector<1x1xf32>
      %145 = math.rsqrt %144 : vector<1x1xf32>
      %146 = vector.broadcast %145 : vector<1x1xf32> to vector<1x32xf32>
      %147 = arith.mulf %136, %146 : vector<1x32xf32>
      %148 = arith.mulf %147, %137 : vector<1x32xf32>
      %149 = arith.truncf %148 : vector<1x32xf32> to vector<1x32xbf16>
      %c0_65 = arith.constant 0 : index
      %c0_66 = arith.constant 0 : index
      %150 = vector.load %arg15[%c0_65, %c0_66] : memref<32x64xbf16, #tpu.memory_space<vmem>>, vector<32x64xbf16>
      %cst_67 = arith.constant dense<0.000000e+00> : vector<1x64xf32>
      %151 = tpu.matmul %149, %150, %cst_67 {dimension_numbers = #tpu.dot_dimension_numbers<[1], [0], [0], [1], [0, 0, 1, 1], [], []>} : vector<1x32xbf16>, vector<32x64xbf16>, vector<1x64xf32> -> vector<1x64xf32>
      %c0_68 = arith.constant 0 : index
      %c0_69 = arith.constant 0 : index
      %c0_70 = arith.constant 0 : index
      %152 = vector.load %arg16[%c0_68, %c0_69, %c0_70] : memref<1x1x64xf32, #tpu.memory_space<vmem>>, vector<1x1x64xf32>
      %153 = vector.shape_cast %152 : vector<1x1x64xf32> to vector<1x64xf32>
      %154 = vector.shape_cast %151 : vector<1x64xf32> to vector<1x1x64xf32>
      tpu.vector_store %arg16[%c0_68, %c0_69, %c0_70], %154 {strides = array<i32>} : memref<1x1x64xf32, #tpu.memory_space<vmem>>, vector<1x1x64xf32>,
    } else {
    }
    return
  }
  func.func @transform_0(%arg0: i32, %arg1: i32) -> (i32, i32, i32) {
    %c0_i32 = arith.constant 0 : i32
    %c0_i32_0 = arith.constant 0 : i32
    %c0_i32_1 = arith.constant 0 : i32
    return %arg0, %c0_i32, %c0_i32_0 : i32, i32, i32
  }
  func.func @transform_1(%arg0: i32, %arg1: i32) -> (i32, i32, i32) {
    %c0_i32 = arith.constant 0 : i32
    %c0_i32_0 = arith.constant 0 : i32
    %c0_i32_1 = arith.constant 0 : i32
    return %arg1, %c0_i32, %c0_i32_0 : i32, i32, i32
  }
  func.func @transform_2(%arg0: i32, %arg1: i32) -> (i32, i32, i32, i32) {
    %c0_i32 = arith.constant 0 : i32
    %c0_i32_0 = arith.constant 0 : i32
    %c0_i32_1 = arith.constant 0 : i32
    %c0_i32_2 = arith.constant 0 : i32
    return %arg1, %c0_i32, %c0_i32_0, %c0_i32_1 : i32, i32, i32, i32
  }
  func.func @transform_3(%arg0: i32, %arg1: i32) -> (i32, i32, i32, i32) {
    %c0_i32 = arith.constant 0 : i32
    %c0_i32_0 = arith.constant 0 : i32
    %c0_i32_1 = arith.constant 0 : i32
    %c0_i32_2 = arith.constant 0 : i32
    return %arg1, %c0_i32, %c0_i32_0, %c0_i32_1 : i32, i32, i32, i32
  }
  func.func @transform_4(%arg0: i32, %arg1: i32) -> (i32, i32, i32, i32) {
    %c0_i32 = arith.constant 0 : i32
    %c0_i32_0 = arith.constant 0 : i32
    %c0_i32_1 = arith.constant 0 : i32
    %c0_i32_2 = arith.constant 0 : i32
    return %arg1, %c0_i32, %c0_i32_0, %c0_i32_1 : i32, i32, i32, i32
  }
  func.func @transform_5(%arg0: i32, %arg1: i32) -> (i32, i32, i32, i32) {
    %c0_i32 = arith.constant 0 : i32
    %c0_i32_0 = arith.constant 0 : i32
    %c0_i32_1 = arith.constant 0 : i32
    %c0_i32_2 = arith.constant 0 : i32
    return %arg1, %c0_i32, %c0_i32_0, %c0_i32_1 : i32, i32, i32, i32
  }
  func.func @transform_6(%arg0: i32, %arg1: i32) -> (i32, i32, i32) {
    %c0_i32 = arith.constant 0 : i32
    %c0_i32_0 = arith.constant 0 : i32
    %c0_i32_1 = arith.constant 0 : i32
    return %arg1, %c0_i32, %c0_i32_0 : i32, i32, i32
  }
  func.func @transform_7(%arg0: i32, %arg1: i32) -> (i32, i32, i32) {
    %c0_i32 = arith.constant 0 : i32
    %c0_i32_0 = arith.constant 0 : i32
    %c0_i32_1 = arith.constant 0 : i32
    return %arg1, %c0_i32, %c0_i32_0 : i32, i32, i32
  }
  func.func @transform_8(%arg0: i32, %arg1: i32) -> (i32, i32, i32) {
    %c0_i32 = arith.constant 0 : i32
    %c0_i32_0 = arith.constant 0 : i32
    %c0_i32_1 = arith.constant 0 : i32
    return %arg1, %c0_i32, %c0_i32_0 : i32, i32, i32
  }
  func.func @transform_9(%arg0: i32, %arg1: i32) -> (i32, i32, i32) {
    %c0_i32 = arith.constant 0 : i32
    %c0_i32_0 = arith.constant 0 : i32
    %c0_i32_1 = arith.constant 0 : i32
    return %arg1, %c0_i32, %c0_i32_0 : i32, i32, i32
  }
  func.func @transform_10(%arg0: i32, %arg1: i32) -> (i32, i32) {
    %c0_i32 = arith.constant 0 : i32
    %c0_i32_0 = arith.constant 0 : i32
    %c0_i32_1 = arith.constant 0 : i32
    return %c0_i32, %c0_i32_0 : i32, i32
  }
  func.func @transform_11(%arg0: i32, %arg1: i32) -> (i32, i32) {
    %c0_i32 = arith.constant 0 : i32
    %c0_i32_0 = arith.constant 0 : i32
    %c0_i32_1 = arith.constant 0 : i32
    return %c0_i32, %c0_i32_0 : i32, i32
  }
  func.func @transform_12(%arg0: i32, %arg1: i32) -> (i32, i32) {
    %c0_i32 = arith.constant 0 : i32
    %c0_i32_0 = arith.constant 0 : i32
    %c0_i32_1 = arith.constant 0 : i32
    return %c0_i32, %c0_i32_0 : i32, i32
  }
  func.func @transform_13(%arg0: i32, %arg1: i32) -> (i32, i32) {
    %c0_i32 = arith.constant 0 : i32
    %c0_i32_0 = arith.constant 0 : i32
    %c0_i32_1 = arith.constant 0 : i32
    return %c0_i32, %c0_i32_0 : i32, i32
  }
  func.func @transform_14(%arg0: i32, %arg1: i32) -> (i32, i32, i32) {
    %c0_i32 = arith.constant 0 : i32
    %c0_i32_0 = arith.constant 0 : i32
    %c0_i32_1 = arith.constant 0 : i32
    return %arg0, %c0_i32, %c0_i32_0 : i32, i32, i32
  }
}

</mosaic_0001>

<llo_original>
// kernel: tpu_custom_call.1
$region0: #{tpu_custom_call.1}
  #allocation0 [shape = 'u32[]', space=smem, size = 0x4, offset = 0x4, fixed_abs, tag = 'smem constant byte address 0x4 - core index']
  #allocation1 [shape = 'u32[144,128]{1,0:T(1,128)}', space=vmem, size = 0x12000, scoped, tag = 'internal scratch']
  #allocation2 [shape = 'f32[8,32]{1,0:T(8,128)}', space=vmem, size = 0x1000, scoped, tag = 'scratch operand']
  %s0 = inlined_call_operand.vmem [shape: f32[2,8,32], index: 0, kind: input, shape index: {}]
  %s1 = inlined_call_operand.vmem [shape: f32[2,1,32], index: 1, kind: input, shape index: {}]
  %s2 = inlined_call_operand.vmem [shape: bf16[2,4,32,8], index: 2, kind: input, shape index: {}]
  %s3 = inlined_call_operand.vmem [shape: bf16[2,4,32,8], index: 3, kind: input, shape index: {}]
  %s4 = inlined_call_operand.vmem [shape: bf16[2,4,32,8], index: 4, kind: input, shape index: {}]
  %s5 = inlined_call_operand.vmem [shape: bf16[2,4,8,32], index: 5, kind: input, shape index: {}]
  %s6 = inlined_call_operand.vmem [shape: f32[2,1,32], index: 6, kind: input, shape index: {}]
  %s7 = inlined_call_operand.vmem [shape: bf16[2,32,256], index: 7, kind: input, shape index: {}]
  %s8 = inlined_call_operand.vmem [shape: bf16[2,32,256], index: 8, kind: input, shape index: {}]
  %s9 = inlined_call_operand.vmem [shape: bf16[2,256,32], index: 9, kind: input, shape index: {}]
  %s10 = inlined_call_operand.vmem [shape: f32[8,4], index: 10, kind: input, shape index: {}]
  %s11 = inlined_call_operand.vmem [shape: f32[8,4], index: 11, kind: input, shape index: {}]
  %s12 = inlined_call_operand.vmem [shape: f32[1,32], index: 12, kind: input, shape index: {}]
  %s13 = inlined_call_operand.vmem [shape: bf16[32,64], index: 13, kind: input, shape index: {}]
  %s14 = inlined_call_operand.hbm [shape: f32[2,1,64], index: 14, kind: output, shape index: {}]
  %s15 = sld [smem:[#allocation0]]
  $region97: #{tpu_custom_call.1} parent=0
    _
  %s17 = ssub.s32 1, %s15
  %s18 = scalar_select 0, %s17, %s15
  $region1: #{tpu_custom_call.1} parent=0
    #allocation3 [shape = 'u8[1024]{0}', space=vmem, size = 0x400, scoped, tag = 'output window, operand 0']
    #allocation4 [shape = 's32[2]{0}', space=sflag, size = 0x8, scoped, tag = 'scoped memory for tpu_custom_call.1']
    %19 = vsyncpa [#allocation4], 0
    %s20 = scalar_lea.sflag [#allocation4], 1
    %21 = vsyncpa %s20, 0
    loop: start=0, step=1, limit=6
    $region2: #{tpu_custom_call.1} parent=1 // loop_pre_header
      _
    $region3: #{tpu_custom_call.1} parent=1 // loop_header
      %s23 = sphi 0, %s27
      %p24 = scmp.ge.s32.totalorder %s23, 6
      %s30 = sphi 0, %s42
      %s31 = sphi 0, %s38
      %s32 = sphi 0, %s30
      %s33 = sphi 0, %s31
      %s34 = sphi 0, %s32
      %s35 = sphi 0, %s33
      %s45 = sphi 0, %s47
      %s48 = sphi 0, %s45
      %s49 = sphi 0, %s48
      %s65 = sphi 0, %s49
      %s71 = sphi 0, %s73
      %s74 = sphi 0, %s71
      %s75 = sphi 0, %s74
      %s91 = sphi 0, %s75
      %s97 = sphi 0, %s99
      %s100 = sphi 0, %s97
      %s101 = sphi 0, %s100
      %s117 = sphi 0, %s101
      %s123 = sphi 0, %s125
      %s126 = sphi 0, %s123
      %s127 = sphi 0, %s126
      %s143 = sphi 0, %s127
      %s149 = sphi 0, %s151
      %s152 = sphi 0, %s149
      %s153 = sphi 0, %s152
      %s169 = sphi 0, %s153
      %s175 = sphi 0, %s177
      %s178 = sphi 0, %s175
      %s179 = sphi 0, %s178
      %s195 = sphi 0, %s179
      %s201 = sphi 0, %s203
      %s204 = sphi 0, %s201
      %s205 = sphi 0, %s204
      %s221 = sphi 0, %s205
      %s227 = sphi 0, %s229
      %s230 = sphi 0, %s227
      %s231 = sphi 0, %s230
      %s247 = sphi 0, %s231
      %s253 = sphi 0, %s255
      %s256 = sphi 0, %s253
      %s257 = sphi 0, %s256
      %s273 = sphi 0, %s257
      %s279 = sphi 0, %s281
      %s282 = sphi 0, %s279
      %s283 = sphi 0, %s282
      %s299 = sphi 0, %s283
      %s303 = sphi 0, %s303
      %s305 = sphi 0, %s303
      %s306 = sphi 0, %s305
      %s320 = sphi 0, %s306
      %s324 = sphi 0, %s324
      %s326 = sphi 0, %s324
      %s327 = sphi 0, %s326
      %s341 = sphi 0, %s327
      %s345 = sphi 0, %s345
      %s347 = sphi 0, %s345
      %s348 = sphi 0, %s347
      %s362 = sphi 0, %s348
      %s366 = sphi 0, %s366
      %s368 = sphi 0, %s366
      %s369 = sphi 0, %s368
      %s383 = sphi 0, %s369
      %s389 = sphi 0, %s391
      %s392 = sphi 0, %s389
      %s393 = sphi 0, %s392
      %s409 = sphi 0, %s393
    $region4: #{tpu_custom_call.1} parent=1 // loop_header_branch
      %26 = sbr.rel (%p24) target = $region8
    $region5: #{tpu_custom_call.1} parent=1 // loop_body
      %s28 = ssub.s32 %s23, 1
      %s29 = ssub.s32 %s23, 2
      %s36 = sadd.s32 1, %s31
      %p37 = scmp.ge.s32.totalorder %s36, 2
      %s38 = scalar_select %p37, 0, %s36
      %s39 = sadd.s32 1, %s30
      %s40 = scalar_select %p37, %s39, %s30
      %p41 = scmp.ge.s32.totalorder %s40, 2
      %s42 = scalar_select %p41, 0, %s40
      %s43 = ssub.s32 %s30, %s42
      %p44 = scmp.eq.s32.totalorder %s43, 0
      %s46 = sadd.s32 %s45, 1
      %s47 = scalar_select %p44, %s45, %s46
      %p50 = pneg %p44
      %p51 = scmp.eq.s32.totalorder %s23, 3
      %p52 = por %p50, %p51
      %p53 = scmp.ne.s32.totalorder %s45, %s48
      %p54 = scmp.eq.s32.totalorder %s23, 0
      %p55 = por %p53, %p54
      %p56 = scmp.ne.s32.totalorder %s45, %s48
      %p57 = scmp.eq.s32.totalorder %s28, 3
      %p58 = por %p56, %p57
      %p59 = scmp.ne.s32.totalorder %s48, %s49
      %p60 = scmp.eq.s32.totalorder %s28, 0
      %p61 = por %p59, %p60
      %p62 = scmp.ne.s32.totalorder %s48, %s49
      %p63 = scmp.eq.s32.totalorder %s29, 3
      %p64 = por %p62, %p63
      %p66 = scmp.ne.s32.totalorder %s49, %s65
      %p67 = scmp.eq.s32.totalorder %s29, 0
      %p68 = por %p66, %p67
      %s69 = ssub.s32 %s31, %s38
      %p70 = scmp.eq.s32.totalorder %s69, 0
      %s72 = sadd.s32 %s71, 1
      %s73 = scalar_select %p70, %s71, %s72
      %p76 = pneg %p70
      %p77 = scmp.eq.s32.totalorder %s23, 3
      %p78 = por %p76, %p77
      %p79 = scmp.ne.s32.totalorder %s71, %s74
      %p80 = scmp.eq.s32.totalorder %s23, 0
      %p81 = por %p79, %p80
      %p82 = scmp.ne.s32.totalorder %s71, %s74
      %p83 = scmp.eq.s32.totalorder %s28, 3
      %p84 = por %p82, %p83
      %p85 = scmp.ne.s32.totalorder %s74, %s75
      %p86 = scmp.eq.s32.totalorder %s28, 0
      %p87 = por %p85, %p86
      %p88 = scmp.ne.s32.totalorder %s74, %s75
      %p89 = scmp.eq.s32.totalorder %s29, 3
      %p90 = por %p88, %p89
      %p92 = scmp.ne.s32.totalorder %s75, %s91
      %p93 = scmp.eq.s32.totalorder %s29, 0
      %p94 = por %p92, %p93
      %s95 = ssub.s32 %s31, %s38
      %p96 = scmp.eq.s32.totalorder %s95, 0
      %s98 = sadd.s32 %s97, 1
      %s99 = scalar_select %p96, %s97, %s98
      %p102 = pneg %p96
      %p103 = scmp.eq.s32.totalorder %s23, 3
      %p104 = por %p102, %p103
      %p105 = scmp.ne.s32.totalorder %s97, %s100
      %p106 = scmp.eq.s32.totalorder %s23, 0
      %p107 = por %p105, %p106
      %p108 = scmp.ne.s32.totalorder %s97, %s100
      %p109 = scmp.eq.s32.totalorder %s28, 3
      %p110 = por %p108, %p109
      %p111 = scmp.ne.s32.totalorder %s100, %s101
      %p112 = scmp.eq.s32.totalorder %s28, 0
      %p113 = por %p111, %p112
      %p114 = scmp.ne.s32.totalorder %s100, %s101
      %p115 = scmp.eq.s32.totalorder %s29, 3
      %p116 = por %p114, %p115
      %p118 = scmp.ne.s32.totalorder %s101, %s117
      %p119 = scmp.eq.s32.totalorder %s29, 0
      %p120 = por %p118, %p119
      %s121 = ssub.s32 %s31, %s38
      %p122 = scmp.eq.s32.totalorder %s121, 0
      %s124 = sadd.s32 %s123, 1
      %s125 = scalar_select %p122, %s123, %s124
      %p128 = pneg %p122
      %p129 = scmp.eq.s32.totalorder %s23, 3
      %p130 = por %p128, %p129
      %p131 = scmp.ne.s32.totalorder %s123, %s126
      %p132 = scmp.eq.s32.totalorder %s23, 0
      %p133 = por %p131, %p132
      %p134 = scmp.ne.s32.totalorder %s123, %s126
      %p135 = scmp.eq.s32.totalorder %s28, 3
      %p136 = por %p134, %p135
      %p137 = scmp.ne.s32.totalorder %s126, %s127
      %p138 = scmp.eq.s32.totalorder %s28, 0
      %p139 = por %p137, %p138
      %p140 = scmp.ne.s32.totalorder %s126, %s127
      %p141 = scmp.eq.s32.totalorder %s29, 3
      %p142 = por %p140, %p141
      %p144 = scmp.ne.s32.totalorder %s127, %s143
      %p145 = scmp.eq.s32.totalorder %s29, 0
      %p146 = por %p144, %p145
      %s147 = ssub.s32 %s31, %s38
      %p148 = scmp.eq.s32.totalorder %s147, 0
      %s150 = sadd.s32 %s149, 1
      %s151 = scalar_select %p148, %s149, %s150
      %p154 = pneg %p148
      %p155 = scmp.eq.s32.totalorder %s23, 3
      %p156 = por %p154, %p155
      %p157 = scmp.ne.s32.totalorder %s149, %s152
      %p158 = scmp.eq.s32.totalorder %s23, 0
      %p159 = por %p157, %p158
      %p160 = scmp.ne.s32.totalorder %s149, %s152
      %p161 = scmp.eq.s32.totalorder %s28, 3
      %p162 = por %p160, %p161
      %p163 = scmp.ne.s32.totalorder %s152, %s153
      %p164 = scmp.eq.s32.totalorder %s28, 0
      %p165 = por %p163, %p164
      %p166 = scmp.ne.s32.totalorder %s152, %s153
      %p167 = scmp.eq.s32.totalorder %s29, 3
      %p168 = por %p166, %p167
      %p170 = scmp.ne.s32.totalorder %s153, %s169
      %p171 = scmp.eq.s32.totalorder %s29, 0
      %p172 = por %p170, %p171
      %s173 = ssub.s32 %s31, %s38
      %p174 = scmp.eq.s32.totalorder %s173, 0
      %s176 = sadd.s32 %s175, 1
      %s177 = scalar_select %p174, %s175, %s176
      %p180 = pneg %p174
      %p181 = scmp.eq.s32.totalorder %s23, 3
      %p182 = por %p180, %p181
      %p183 = scmp.ne.s32.totalorder %s175, %s178
      %p184 = scmp.eq.s32.totalorder %s23, 0
      %p185 = por %p183, %p184
      %p186 = scmp.ne.s32.totalorder %s175, %s178
      %p187 = scmp.eq.s32.totalorder %s28, 3
      %p188 = por %p186, %p187
      %p189 = scmp.ne.s32.totalorder %s178, %s179
      %p190 = scmp.eq.s32.totalorder %s28, 0
      %p191 = por %p189, %p190
      %p192 = scmp.ne.s32.totalorder %s178, %s179
      %p193 = scmp.eq.s32.totalorder %s29, 3
      %p194 = por %p192, %p193
      %p196 = scmp.ne.s32.totalorder %s179, %s195
      %p197 = scmp.eq.s32.totalorder %s29, 0
      %p198 = por %p196, %p197
      %s199 = ssub.s32 %s31, %s38
      %p200 = scmp.eq.s32.totalorder %s199, 0
      %s202 = sadd.s32 %s201, 1
      %s203 = scalar_select %p200, %s201, %s202
      %p206 = pneg %p200
      %p207 = scmp.eq.s32.totalorder %s23, 3
      %p208 = por %p206, %p207
      %p209 = scmp.ne.s32.totalorder %s201, %s204
      %p210 = scmp.eq.s32.totalorder %s23, 0
      %p211 = por %p209, %p210
      %p212 = scmp.ne.s32.totalorder %s201, %s204
      %p213 = scmp.eq.s32.totalorder %s28, 3
      %p214 = por %p212, %p213
      %p215 = scmp.ne.s32.totalorder %s204, %s205
      %p216 = scmp.eq.s32.totalorder %s28, 0
      %p217 = por %p215, %p216
      %p218 = scmp.ne.s32.totalorder %s204, %s205
      %p219 = scmp.eq.s32.totalorder %s29, 3
      %p220 = por %p218, %p219
      %p222 = scmp.ne.s32.totalorder %s205, %s221
      %p223 = scmp.eq.s32.totalorder %s29, 0
      %p224 = por %p222, %p223
      %s225 = ssub.s32 %s31, %s38
      %p226 = scmp.eq.s32.totalorder %s225, 0
      %s228 = sadd.s32 %s227, 1
      %s229 = scalar_select %p226, %s227, %s228
      %p232 = pneg %p226
      %p233 = scmp.eq.s32.totalorder %s23, 3
      %p234 = por %p232, %p233
      %p235 = scmp.ne.s32.totalorder %s227, %s230
      %p236 = scmp.eq.s32.totalorder %s23, 0
      %p237 = por %p235, %p236
      %p238 = scmp.ne.s32.totalorder %s227, %s230
      %p239 = scmp.eq.s32.totalorder %s28, 3
      %p240 = por %p238, %p239
      %p241 = scmp.ne.s32.totalorder %s230, %s231
      %p242 = scmp.eq.s32.totalorder %s28, 0
      %p243 = por %p241, %p242
      %p244 = scmp.ne.s32.totalorder %s230, %s231
      %p245 = scmp.eq.s32.totalorder %s29, 3
      %p246 = por %p244, %p245
      %p248 = scmp.ne.s32.totalorder %s231, %s247
      %p249 = scmp.eq.s32.totalorder %s29, 0
      %p250 = por %p248, %p249
      %s251 = ssub.s32 %s31, %s38
      %p252 = scmp.eq.s32.totalorder %s251, 0
      %s254 = sadd.s32 %s253, 1
      %s255 = scalar_select %p252, %s253, %s254
      %p258 = pneg %p252
      %p259 = scmp.eq.s32.totalorder %s23, 3
      %p260 = por %p258, %p259
      %p261 = scmp.ne.s32.totalorder %s253, %s256
      %p262 = scmp.eq.s32.totalorder %s23, 0
      %p263 = por %p261, %p262
      %p264 = scmp.ne.s32.totalorder %s253, %s256
      %p265 = scmp.eq.s32.totalorder %s28, 3
      %p266 = por %p264, %p265
      %p267 = scmp.ne.s32.totalorder %s256, %s257
      %p268 = scmp.eq.s32.totalorder %s28, 0
      %p269 = por %p267, %p268
      %p270 = scmp.ne.s32.totalorder %s256, %s257
      %p271 = scmp.eq.s32.totalorder %s29, 3
      %p272 = por %p270, %p271
      %p274 = scmp.ne.s32.totalorder %s257, %s273
      %p275 = scmp.eq.s32.totalorder %s29, 0
      %p276 = por %p274, %p275
      %s277 = ssub.s32 %s31, %s38
      %p278 = scmp.eq.s32.totalorder %s277, 0
      %s280 = sadd.s32 %s279, 1
      %s281 = scalar_select %p278, %s279, %s280
      %p284 = pneg %p278
      %p285 = scmp.eq.s32.totalorder %s23, 3
      %p286 = por %p284, %p285
      %p287 = scmp.ne.s32.totalorder %s279, %s282
      %p288 = scmp.eq.s32.totalorder %s23, 0
      %p289 = por %p287, %p288
      %p290 = scmp.ne.s32.totalorder %s279, %s282
      %p291 = scmp.eq.s32.totalorder %s28, 3
      %p292 = por %p290, %p291
      %p293 = scmp.ne.s32.totalorder %s282, %s283
      %p294 = scmp.eq.s32.totalorder %s28, 0
      %p295 = por %p293, %p294
      %p296 = scmp.ne.s32.totalorder %s282, %s283
      %p297 = scmp.eq.s32.totalorder %s29, 3
      %p298 = por %p296, %p297
      %p300 = scmp.ne.s32.totalorder %s283, %s299
      %p301 = scmp.eq.s32.totalorder %s29, 0
      %p302 = por %p300, %p301
      %s304 = sadd.s32 %s303, 1
      %p307 = scmp.eq.s32.totalorder %s23, 3
      %p308 = scmp.ne.s32.totalorder %s303, %s305
      %p309 = scmp.eq.s32.totalorder %s23, 0
      %p310 = por %p308, %p309
      %p311 = scmp.ne.s32.totalorder %s303, %s305
      %p312 = scmp.eq.s32.totalorder %s28, 3
      %p313 = por %p311, %p312
      %p314 = scmp.ne.s32.totalorder %s305, %s306
      %p315 = scmp.eq.s32.totalorder %s28, 0
      %p316 = por %p314, %p315
      %p317 = scmp.ne.s32.totalorder %s305, %s306
      %p318 = scmp.eq.s32.totalorder %s29, 3
      %p319 = por %p317, %p318
      %p321 = scmp.ne.s32.totalorder %s306, %s320
      %p322 = scmp.eq.s32.totalorder %s29, 0
      %p323 = por %p321, %p322
      %s325 = sadd.s32 %s324, 1
      %p328 = scmp.eq.s32.totalorder %s23, 3
      %p329 = scmp.ne.s32.totalorder %s324, %s326
      %p330 = scmp.eq.s32.totalorder %s23, 0
      %p331 = por %p329, %p330
      %p332 = scmp.ne.s32.totalorder %s324, %s326
      %p333 = scmp.eq.s32.totalorder %s28, 3
      %p334 = por %p332, %p333
      %p335 = scmp.ne.s32.totalorder %s326, %s327
      %p336 = scmp.eq.s32.totalorder %s28, 0
      %p337 = por %p335, %p336
      %p338 = scmp.ne.s32.totalorder %s326, %s327
      %p339 = scmp.eq.s32.totalorder %s29, 3
      %p340 = por %p338, %p339
      %p342 = scmp.ne.s32.totalorder %s327, %s341
      %p343 = scmp.eq.s32.totalorder %s29, 0
      %p344 = por %p342, %p343
      %s346 = sadd.s32 %s345, 1
      %p349 = scmp.eq.s32.totalorder %s23, 3
      %p350 = scmp.ne.s32.totalorder %s345, %s347
      %p351 = scmp.eq.s32.totalorder %s23, 0
      %p352 = por %p350, %p351
      %p353 = scmp.ne.s32.totalorder %s345, %s347
      %p354 = scmp.eq.s32.totalorder %s28, 3
      %p355 = por %p353, %p354
      %p356 = scmp.ne.s32.totalorder %s347, %s348
      %p357 = scmp.eq.s32.totalorder %s28, 0
      %p358 = por %p356, %p357
      %p359 = scmp.ne.s32.totalorder %s347, %s348
      %p360 = scmp.eq.s32.totalorder %s29, 3
      %p361 = por %p359, %p360
      %p363 = scmp.ne.s32.totalorder %s348, %s362
      %p364 = scmp.eq.s32.totalorder %s29, 0
      %p365 = por %p363, %p364
      %s367 = sadd.s32 %s366, 1
      %p370 = scmp.eq.s32.totalorder %s23, 3
      %p371 = scmp.ne.s32.totalorder %s366, %s368
      %p372 = scmp.eq.s32.totalorder %s23, 0
      %p373 = por %p371, %p372
      %p374 = scmp.ne.s32.totalorder %s366, %s368
      %p375 = scmp.eq.s32.totalorder %s28, 3
      %p376 = por %p374, %p375
      %p377 = scmp.ne.s32.totalorder %s368, %s369
      %p378 = scmp.eq.s32.totalorder %s28, 0
      %p379 = por %p377, %p378
      %p380 = scmp.ne.s32.totalorder %s368, %s369
      %p381 = scmp.eq.s32.totalorder %s29, 3
      %p382 = por %p380, %p381
      %p384 = scmp.ne.s32.totalorder %s369, %s383
      %p385 = scmp.eq.s32.totalorder %s29, 0
      %p386 = por %p384, %p385
      %s387 = ssub.s32 %s30, %s42
      %p388 = scmp.eq.s32.totalorder %s387, 0
      %s390 = sadd.s32 %s389, 1
      %s391 = scalar_select %p388, %s389, %s390
      %p394 = pneg %p388
      %p395 = scmp.eq.s32.totalorder %s23, 3
      %p396 = por %p394, %p395
      %p397 = scmp.ne.s32.totalorder %s389, %s392
      %p398 = scmp.eq.s32.totalorder %s23, 0
      %p399 = por %p397, %p398
      %p400 = scmp.ne.s32.totalorder %s389, %s392
      %p401 = scmp.eq.s32.totalorder %s28, 3
      %p402 = por %p400, %p401
      %p403 = scmp.ne.s32.totalorder %s392, %s393
      %p404 = scmp.eq.s32.totalorder %s28, 0
      %p405 = por %p403, %p404
      %p406 = scmp.ne.s32.totalorder %s392, %s393
      %p407 = scmp.eq.s32.totalorder %s29, 3
      %p408 = por %p406, %p407
      %p410 = scmp.ne.s32.totalorder %s393, %s409
      %p411 = scmp.eq.s32.totalorder %s29, 0
      %p412 = por %p410, %p411
      %p413 = scmp.le.s32.totalorder 1, %s23
      %p414 = scmp.lt.s32.totalorder %s23, 5
      %p415 = pnand %p413, %p414
      %p416 = pneg %p415
      // Predicated region
      $region9: #{tpu_custom_call.1} parent=5 // pred_check
        _
      $region10: #{tpu_custom_call.1} parent=5 // pred_check_branch
        %418 = sbr.rel (%p415) target = $region12
      $region11: #{tpu_custom_call.1} parent=5 // pred_region
        %s419 = ssub.s32 %s23, 1
        // Predicated region
        $region13: #{tpu_custom_call.1} parent=11 // pred_check
          %p420 = pneg %p316
        $region14: #{tpu_custom_call.1} parent=11 // pred_check_branch
          %422 = sbr.rel (%p420) target = $region16
        $region15: #{tpu_custom_call.1} parent=11 // pred_region
          _
        $region16: #{tpu_custom_call.1} parent=11 // pred_fallthru
          _
        // Predicated region
        $region17: #{tpu_custom_call.1} parent=11 // pred_check
          %p423 = pneg %p337
        $region18: #{tpu_custom_call.1} parent=11 // pred_check_branch
          %425 = sbr.rel (%p423) target = $region20
        $region19: #{tpu_custom_call.1} parent=11 // pred_region
          _
        $region20: #{tpu_custom_call.1} parent=11 // pred_fallthru
          _
        // Predicated region
        $region21: #{tpu_custom_call.1} parent=11 // pred_check
          %p426 = pneg %p358
        $region22: #{tpu_custom_call.1} parent=11 // pred_check_branch
          %428 = sbr.rel (%p426) target = $region24
        $region23: #{tpu_custom_call.1} parent=11 // pred_region
          _
        $region24: #{tpu_custom_call.1} parent=11 // pred_fallthru
          _
        // Predicated region
        $region25: #{tpu_custom_call.1} parent=11 // pred_check
          %p429 = pneg %p379
        $region26: #{tpu_custom_call.1} parent=11 // pred_check_branch
          %431 = sbr.rel (%p429) target = $region28
        $region27: #{tpu_custom_call.1} parent=11 // pred_region
          _
        $region28: #{tpu_custom_call.1} parent=11 // pred_fallthru
          _
      $region12: #{tpu_custom_call.1} parent=5 // pred_fallthru
        _
      %p432 = scmp.lt.s32.totalorder %s23, 4
      // Predicated region
      $region29: #{tpu_custom_call.1} parent=5 // pred_check
        %p433 = pneg %p432
      $region30: #{tpu_custom_call.1} parent=5 // pred_check_branch
        %435 = sbr.rel (%p433) target = $region32
      $region31: #{tpu_custom_call.1} parent=5 // pred_region
        // Predicated region
        $region33: #{tpu_custom_call.1} parent=31 // pred_check
          %p436 = pneg %p55
        $region34: #{tpu_custom_call.1} parent=31 // pred_check_branch
          %438 = sbr.rel (%p436) target = $region36
        $region35: #{tpu_custom_call.1} parent=31 // pred_region
          %p439 = scmp.lt.s32.totalorder %s30, 1
          %s440 = scalar_select %p439, %s30, 1
          %s441 = smul.addr %s440, 8
          %s442 = scalar_lea.vmem %s0, %s441
        $region36: #{tpu_custom_call.1} parent=31 // pred_fallthru
          _
        // Predicated region
        $region37: #{tpu_custom_call.1} parent=31 // pred_check
          %p443 = pneg %p81
        $region38: #{tpu_custom_call.1} parent=31 // pred_check_branch
          %445 = sbr.rel (%p443) target = $region40
        $region39: #{tpu_custom_call.1} parent=31 // pred_region
          %p446 = scmp.lt.s32.totalorder %s31, 1
          %s447 = scalar_select %p446, %s31, 1
          %s448 = scalar_lea.vmem %s1, %s447
        $region40: #{tpu_custom_call.1} parent=31 // pred_fallthru
          _
        // Predicated region
        $region41: #{tpu_custom_call.1} parent=31 // pred_check
          %p449 = pneg %p107
        $region42: #{tpu_custom_call.1} parent=31 // pred_check_branch
          %451 = sbr.rel (%p449) target = $region44
        $region43: #{tpu_custom_call.1} parent=31 // pred_region
          %p452 = scmp.lt.s32.totalorder %s31, 1
          %s453 = scalar_select %p452, %s31, 1
          %s454 = smul.addr %s453, 16
          %s455 = smul.addr %s454, 4
          %s456 = scalar_lea.vmem %s2, %s455
        $region44: #{tpu_custom_call.1} parent=31 // pred_fallthru
          _
        // Predicated region
        $region45: #{tpu_custom_call.1} parent=31 // pred_check
          %p457 = pneg %p133
        $region46: #{tpu_custom_call.1} parent=31 // pred_check_branch
          %459 = sbr.rel (%p457) target = $region48
        $region47: #{tpu_custom_call.1} parent=31 // pred_region
          %p460 = scmp.lt.s32.totalorder %s31, 1
          %s461 = scalar_select %p460, %s31, 1
          %s462 = smul.addr %s461, 16
          %s463 = smul.addr %s462, 4
          %s464 = scalar_lea.vmem %s3, %s463
        $region48: #{tpu_custom_call.1} parent=31 // pred_fallthru
          _
        // Predicated region
        $region49: #{tpu_custom_call.1} parent=31 // pred_check
          %p465 = pneg %p159
        $region50: #{tpu_custom_call.1} parent=31 // pred_check_branch
          %467 = sbr.rel (%p465) target = $region52
        $region51: #{tpu_custom_call.1} parent=31 // pred_region
          %p468 = scmp.lt.s32.totalorder %s31, 1
          %s469 = scalar_select %p468, %s31, 1
          %s470 = smul.addr %s469, 16
          %s471 = smul.addr %s470, 4
          %s472 = scalar_lea.vmem %s4, %s471
        $region52: #{tpu_custom_call.1} parent=31 // pred_fallthru
          _
        // Predicated region
        $region53: #{tpu_custom_call.1} parent=31 // pred_check
          %p473 = pneg %p185
        $region54: #{tpu_custom_call.1} parent=31 // pred_check_branch
          %475 = sbr.rel (%p473) target = $region56
        $region55: #{tpu_custom_call.1} parent=31 // pred_region
          %p476 = scmp.lt.s32.totalorder %s31, 1
          %s477 = scalar_select %p476, %s31, 1
          %s478 = smul.addr %s477, 4
          %s479 = smul.addr %s478, 4
          %s480 = scalar_lea.vmem %s5, %s479
        $region56: #{tpu_custom_call.1} parent=31 // pred_fallthru
          _
        // Predicated region
        $region57: #{tpu_custom_call.1} parent=31 // pred_check
          %p481 = pneg %p211
        $region58: #{tpu_custom_call.1} parent=31 // pred_check_branch
          %483 = sbr.rel (%p481) target = $region60
        $region59: #{tpu_custom_call.1} parent=31 // pred_region
          %p484 = scmp.lt.s32.totalorder %s31, 1
          %s485 = scalar_select %p484, %s31, 1
          %s486 = scalar_lea.vmem %s6, %s485
        $region60: #{tpu_custom_call.1} parent=31 // pred_fallthru
          _
        // Predicated region
        $region61: #{tpu_custom_call.1} parent=31 // pred_check
          %p487 = pneg %p237
        $region62: #{tpu_custom_call.1} parent=31 // pred_check_branch
          %489 = sbr.rel (%p487) target = $region64
        $region63: #{tpu_custom_call.1} parent=31 // pred_region
          %p490 = scmp.lt.s32.totalorder %s31, 1
          %s491 = scalar_select %p490, %s31, 1
          %s492 = smul.addr %s491, 8
          %s493 = smul.addr %s492, 4
          %s494 = scalar_lea.vmem %s7, %s493
        $region64: #{tpu_custom_call.1} parent=31 // pred_fallthru
          _
        // Predicated region
        $region65: #{tpu_custom_call.1} parent=31 // pred_check
          %p495 = pneg %p263
        $region66: #{tpu_custom_call.1} parent=31 // pred_check_branch
          %497 = sbr.rel (%p495) target = $region68
        $region67: #{tpu_custom_call.1} parent=31 // pred_region
          %p498 = scmp.lt.s32.totalorder %s31, 1
          %s499 = scalar_select %p498, %s31, 1
          %s500 = smul.addr %s499, 8
          %s501 = smul.addr %s500, 4
          %s502 = scalar_lea.vmem %s8, %s501
        $region68: #{tpu_custom_call.1} parent=31 // pred_fallthru
          _
        // Predicated region
        $region69: #{tpu_custom_call.1} parent=31 // pred_check
          %p503 = pneg %p289
        $region70: #{tpu_custom_call.1} parent=31 // pred_check_branch
          %505 = sbr.rel (%p503) target = $region72
        $region71: #{tpu_custom_call.1} parent=31 // pred_region
          %p506 = scmp.lt.s32.totalorder %s31, 1
          %s507 = scalar_select %p506, %s31, 1
          %s508 = smul.addr %s507, 32
          %s509 = smul.addr %s508, 4
          %s510 = scalar_lea.vmem %s9, %s509
        $region72: #{tpu_custom_call.1} parent=31 // pred_fallthru
          _
      $region32: #{tpu_custom_call.1} parent=5 // pred_fallthru
        _
      %p511 = scmp.le.s32.totalorder 1, %s23
      %p512 = scmp.lt.s32.totalorder %s23, 5
      %p513 = pnand %p511, %p512
      %p514 = pneg %p513
      // Predicated region
      $region73: #{tpu_custom_call.1} parent=5 // pred_check
        _
      $region74: #{tpu_custom_call.1} parent=5 // pred_check_branch
        %516 = sbr.rel (%p513) target = $region76
      $region75: #{tpu_custom_call.1} parent=5 // pred_region
        %s517 = ssub.s32 %s23, 1
        %p518 = scmp.lt.s32.totalorder %s32, 1
        %s519 = scalar_select %p518, %s32, 1
        %s520 = smul.addr %s519, 8
        %s521 = scalar_lea.vmem %s0, %s520
        %p522 = pneg %p61
        %p523 = pneg %p58
        %p524 = scmp.lt.s32.totalorder %s33, 1
        %s525 = scalar_select %p524, %s33, 1
        %s526 = scalar_lea.vmem %s1, %s525
        %p527 = pneg %p87
        %p528 = pneg %p84
        %p529 = scmp.lt.s32.totalorder %s33, 1
        %s530 = scalar_select %p529, %s33, 1
        %s531 = smul.addr %s530, 16
        %s532 = smul.addr %s531, 4
        %s533 = scalar_lea.vmem %s2, %s532
        %p534 = pneg %p113
        %p535 = pneg %p110
        %p536 = scmp.lt.s32.totalorder %s33, 1
        %s537 = scalar_select %p536, %s33, 1
        %s538 = smul.addr %s537, 16
        %s539 = smul.addr %s538, 4
        %s540 = scalar_lea.vmem %s3, %s539
        %p541 = pneg %p139
        %p542 = pneg %p136
        %p543 = scmp.lt.s32.totalorder %s33, 1
        %s544 = scalar_select %p543, %s33, 1
        %s545 = smul.addr %s544, 16
        %s546 = smul.addr %s545, 4
        %s547 = scalar_lea.vmem %s4, %s546
        %p548 = pneg %p165
        %p549 = pneg %p162
        %p550 = scmp.lt.s32.totalorder %s33, 1
        %s551 = scalar_select %p550, %s33, 1
        %s552 = smul.addr %s551, 4
        %s553 = smul.addr %s552, 4
        %s554 = scalar_lea.vmem %s5, %s553
        %p555 = pneg %p191
        %p556 = pneg %p188
        %p557 = scmp.lt.s32.totalorder %s33, 1
        %s558 = scalar_select %p557, %s33, 1
        %s559 = scalar_lea.vmem %s6, %s558
        %p560 = pneg %p217
        %p561 = pneg %p214
        %p562 = scmp.lt.s32.totalorder %s33, 1
        %s563 = scalar_select %p562, %s33, 1
        %s564 = smul.addr %s563, 8
        %s565 = smul.addr %s564, 4
        %s566 = scalar_lea.vmem %s7, %s565
        %p567 = pneg %p243
        %p568 = pneg %p240
        %p569 = scmp.lt.s32.totalorder %s33, 1
        %s570 = scalar_select %p569, %s33, 1
        %s571 = smul.addr %s570, 8
        %s572 = smul.addr %s571, 4
        %s573 = scalar_lea.vmem %s8, %s572
        %p574 = pneg %p269
        %p575 = pneg %p266
        %p576 = scmp.lt.s32.totalorder %s33, 1
        %s577 = scalar_select %p576, %s33, 1
        %s578 = smul.addr %s577, 32
        %s579 = smul.addr %s578, 4
        %s580 = scalar_lea.vmem %s9, %s579
        %p581 = pneg %p295
        %p582 = pneg %p292
        %p583 = pneg %p316
        %p584 = pneg %p313
        %p585 = pneg %p337
        %p586 = pneg %p334
        %p587 = pneg %p358
        %p588 = pneg %p355
        %p589 = pneg %p379
        %p590 = pneg %p376
        %p591 = pneg %p405
        %p592 = pneg %p402
        %s593 = sand.u32 %s392, 1
        %s594 = scalar_lea.sflag [#allocation4], %s593
        %s595 = sand.u32 %s392, 1
        %s596 = scalar_lea.vmem [#allocation3], %s595
        %p597 = scmp.lt.s32.totalorder %s32, 1
        %s598 = scalar_select %p597, %s32, 1
        %s599 = smul.addr %s598, 8
        %s600 = scalar_lea.vmem %s0, %s599
        %p601 = scmp.lt.s32.totalorder %s33, 1
        %s602 = scalar_select %p601, %s33, 1
        %s603 = scalar_lea.vmem %s1, %s602
        %p604 = scmp.lt.s32.totalorder %s33, 1
        %s605 = scalar_select %p604, %s33, 1
        %s606 = smul.addr %s605, 16
        %s607 = smul.addr %s606, 4
        %s608 = scalar_lea.vmem %s2, %s607
        %p609 = scmp.lt.s32.totalorder %s33, 1
        %s610 = scalar_select %p609, %s33, 1
        %s611 = smul.addr %s610, 16
        %s612 = smul.addr %s611, 4
        %s613 = scalar_lea.vmem %s3, %s612
        %p614 = scmp.lt.s32.totalorder %s33, 1
        %s615 = scalar_select %p614, %s33, 1
        %s616 = smul.addr %s615, 16
        %s617 = smul.addr %s616, 4
        %s618 = scalar_lea.vmem %s4, %s617
        %p619 = scmp.lt.s32.totalorder %s33, 1
        %s620 = scalar_select %p619, %s33, 1
        %s621 = smul.addr %s620, 4
        %s622 = smul.addr %s621, 4
        %s623 = scalar_lea.vmem %s5, %s622
        %p624 = scmp.lt.s32.totalorder %s33, 1
        %s625 = scalar_select %p624, %s33, 1
        %s626 = scalar_lea.vmem %s6, %s625
        %p627 = scmp.lt.s32.totalorder %s33, 1
        %s628 = scalar_select %p627, %s33, 1
        %s629 = smul.addr %s628, 8
        %s630 = smul.addr %s629, 4
        %s631 = scalar_lea.vmem %s7, %s630
        %p632 = scmp.lt.s32.totalorder %s33, 1
        %s633 = scalar_select %p632, %s33, 1
        %s634 = smul.addr %s633, 8
        %s635 = smul.addr %s634, 4
        %s636 = scalar_lea.vmem %s8, %s635
        %p637 = scmp.lt.s32.totalorder %s33, 1
        %s638 = scalar_select %p637, %s33, 1
        %s639 = smul.addr %s638, 32
        %s640 = smul.addr %s639, 4
        %s641 = scalar_lea.vmem %s9, %s640
        %p643 = scmp.eq.s32.totalorder %s33, 0
        // Predicated region
        $region77: #{tpu_custom_call.1} parent=75 // pred_check
          %p644 = pneg %p643
        $region78: #{tpu_custom_call.1} parent=75 // pred_check_branch
          %646 = sbr.rel (%p644) target = $region80
        $region79: #{tpu_custom_call.1} parent=75 // pred_region
          %v647 = vld [vmem:[%s600] sm:$0xff]
          %vm648 = vcmask 261120
          %649 = vst.msk [vmem:[#allocation2] sm:$0xff] %vm648, %v647
        $region80: #{tpu_custom_call.1} parent=75 // pred_fallthru
          _
        %v650 = vld [vmem:[#allocation2] sm:$0xff]
        %v651 = vld [vmem:[%s603] sm:$0x1]
        %v652 = vmul.f32 %v650, %v650
        %vm653 = vcmask 261120
        %v654 = vsel %vm653, %v652, 0.0
        %655 = vadd.xlane.f32.xlu0 %v654
        %v656 = vpop.xlane.xlu0 %655
        %v657 = vrcp.pop 32.0
        %v658 = vmul.f32 %v656, %v657
        %v659 = vadd.f32 %v658, 1e-05
        %v660 = vrsqrt.pop %v659
        %v661 = vmul.f32 %v650, %v660
        %v663 = vlaneseq
        %v664 = vshrl.u32 %v663, 7
        %v665 = vsub.s32 0, %v664
        %v666 = vrot.slane %v651, %v665
        %v668 = vmul.f32 %v661, %v666
        %v669 = vpack.c.bf16 %v668, %v668
        %v670 = vld [vmem:[%s608] sm:$0xf]
        %v671 = vld [vmem:[%s608 + $0x4] sm:$0xf]
        %v672 = vld [vmem:[%s608 + $0x8] sm:$0xf]
        %v673 = vld [vmem:[%s608 + $0xc] sm:$0xf]
        %v674 = vld [vmem:[%s608 + $0x10] sm:$0xf]
        %v675 = vld [vmem:[%s608 + $0x14] sm:$0xf]
        %v676 = vld [vmem:[%s608 + $0x18] sm:$0xf]
        %v677 = vld [vmem:[%s608 + $0x1c] sm:$0xf]
        %v678 = vld [vmem:[%s608 + $0x20] sm:$0xf]
        %v679 = vld [vmem:[%s608 + $0x24] sm:$0xf]
        %v680 = vld [vmem:[%s608 + $0x28] sm:$0xf]
        %v681 = vld [vmem:[%s608 + $0x2c] sm:$0xf]
        %v682 = vld [vmem:[%s608 + $0x30] sm:$0xf]
        %v683 = vld [vmem:[%s608 + $0x34] sm:$0xf]
        %v684 = vld [vmem:[%s608 + $0x38] sm:$0xf]
        %v685 = vld [vmem:[%s608 + $0x3c] sm:$0xf]
        %v690 = vunpack.c.l.b16 %v670
        %v691 = vunpack.c.l.b16 %v671
        %v692 = vunpack.c.l.b16 %v672
        %v693 = vunpack.c.l.b16 %v673
        %v694 = vpack.c.b16 %v691, %v690
        %v695 = vpack.c.b16 %v693, %v692
        %v699 = vsel %vm653, %v669, 0
        %701 = vmatprep.subr.bf16.mxu0 0
        %702 = vmatpush1.bf16.msra.mxu0 %v694
        %703 = vmatprep.subr.bf16.mxu0 0
        %704 = vmatpush1.bf16.msra.mxu0 %v695
        %705 = vmatprep.subr.bf16.mxu0 0
        %706 = vmatpush1.bf16.msra.mxu0 0
        %707 = vmatprep.subr.bf16.mxu0 0
        %708 = vmatpush1.bf16.msra.mxu0 0
        %709 = vmatprep.subr.bf16.mxu0 0
        %710 = vmatpush1.bf16.msra.mxu0 0
        %711 = vmatprep.subr.bf16.mxu0 0
        %712 = vmatpush1.bf16.msra.mxu0 0
        %713 = vmatprep.subr.bf16.mxu0 0
        %714 = vmatpush1.bf16.msra.mxu0 0
        %715 = vmatprep.subr.bf16.mxu0 0
        %716 = vmatpush1.bf16.msra.mxu0 0
        %717 = vmatprep.subr.bf16.mxu0 0
        %718 = vmatpush1.bf16.msra.mxu0 0
        %719 = vmatprep.subr.bf16.mxu0 0
        %720 = vmatpush1.bf16.msra.mxu0 0
        %721 = vmatprep.subr.bf16.mxu0 0
        %722 = vmatpush1.bf16.msra.mxu0 0
        %723 = vmatprep.subr.bf16.mxu0 0
        %724 = vmatpush1.bf16.msra.mxu0 0
        %725 = vmatprep.subr.bf16.mxu0 0
        %726 = vmatpush1.bf16.msra.mxu0 0
        %727 = vmatprep.subr.bf16.mxu0 0
        %728 = vmatpush1.bf16.msra.mxu0 0
        %729 = vmatprep.subr.bf16.mxu0 0
        %730 = vmatpush1.bf16.msra.mxu0 0
        %731 = vmatprep.subr.bf16.mxu0 0
        %732 = vmatpush1.bf16.msra.mxu0 0
        %733 = vmatprep.mubr.bf16.mxu0 0
        %734 = vmatmul.mubr.bf16.gmra.mrb[0].mxu0 %v699
        %v735 = vpop.f32.mrb[0].mxu0
        %v736 = vadd.f32 0.0, %v735
        %v737 = vpop.f32.mrb[0].mxu0
        %v738 = vpop.f32.mrb[0].mxu0
        %v739 = vpop.f32.mrb[0].mxu0
        %740 = vdwg.mxu0
        %v745 = vunpack.c.l.b16 %v674
        %v746 = vunpack.c.l.b16 %v675
        %v747 = vunpack.c.l.b16 %v676
        %v748 = vunpack.c.l.b16 %v677
        %v749 = vpack.c.b16 %v746, %v745
        %v750 = vpack.c.b16 %v748, %v747
        %753 = vmatprep.subr.bf16.mxu0 0
        %754 = vmatpush1.bf16.msra.mxu0 %v749
        %755 = vmatprep.subr.bf16.mxu0 0
        %756 = vmatpush1.bf16.msra.mxu0 %v750
        %757 = vmatprep.subr.bf16.mxu0 0
        %758 = vmatpush1.bf16.msra.mxu0 0
        %759 = vmatprep.subr.bf16.mxu0 0
        %760 = vmatpush1.bf16.msra.mxu0 0
        %761 = vmatprep.subr.bf16.mxu0 0
        %762 = vmatpush1.bf16.msra.mxu0 0
        %763 = vmatprep.subr.bf16.mxu0 0
        %764 = vmatpush1.bf16.msra.mxu0 0
        %765 = vmatprep.subr.bf16.mxu0 0
        %766 = vmatpush1.bf16.msra.mxu0 0
        %767 = vmatprep.subr.bf16.mxu0 0
        %768 = vmatpush1.bf16.msra.mxu0 0
        %769 = vmatprep.subr.bf16.mxu0 0
        %770 = vmatpush1.bf16.msra.mxu0 0
        %771 = vmatprep.subr.bf16.mxu0 0
        %772 = vmatpush1.bf16.msra.mxu0 0
        %773 = vmatprep.subr.bf16.mxu0 0
        %774 = vmatpush1.bf16.msra.mxu0 0
        %775 = vmatprep.subr.bf16.mxu0 0
        %776 = vmatpush1.bf16.msra.mxu0 0
        %777 = vmatprep.subr.bf16.mxu0 0
        %778 = vmatpush1.bf16.msra.mxu0 0
        %779 = vmatprep.subr.bf16.mxu0 0
        %780 = vmatpush1.bf16.msra.mxu0 0
        %781 = vmatprep.subr.bf16.mxu0 0
        %782 = vmatpush1.bf16.msra.mxu0 0
        %783 = vmatprep.subr.bf16.mxu0 0
        %784 = vmatpush1.bf16.msra.mxu0 0
        %785 = vmatprep.mubr.bf16.mxu0 0
        %786 = vmatmul.mubr.bf16.gmra.mrb[0].mxu0 %v699
        %v787 = vpop.f32.mrb[0].mxu0
        %v788 = vadd.f32 0.0, %v787
        %v789 = vpop.f32.mrb[0].mxu0
        %v790 = vpop.f32.mrb[0].mxu0
        %v791 = vpop.f32.mrb[0].mxu0
        %792 = vdwg.mxu0
        %v797 = vunpack.c.l.b16 %v678
        %v798 = vunpack.c.l.b16 %v679
        %v799 = vunpack.c.l.b16 %v680
        %v800 = vunpack.c.l.b16 %v681
        %v801 = vpack.c.b16 %v798, %v797
        %v802 = vpack.c.b16 %v800, %v799
        %805 = vmatprep.subr.bf16.mxu0 0
        %806 = vmatpush1.bf16.msra.mxu0 %v801
        %807 = vmatprep.subr.bf16.mxu0 0
        %808 = vmatpush1.bf16.msra.mxu0 %v802
        %809 = vmatprep.subr.bf16.mxu0 0
        %810 = vmatpush1.bf16.msra.mxu0 0
        %811 = vmatprep.subr.bf16.mxu0 0
        %812 = vmatpush1.bf16.msra.mxu0 0
        %813 = vmatprep.subr.bf16.mxu0 0
        %814 = vmatpush1.bf16.msra.mxu0 0
        %815 = vmatprep.subr.bf16.mxu0 0
        %816 = vmatpush1.bf16.msra.mxu0 0
        %817 = vmatprep.subr.bf16.mxu0 0
        %818 = vmatpush1.bf16.msra.mxu0 0
        %819 = vmatprep.subr.bf16.mxu0 0
        %820 = vmatpush1.bf16.msra.mxu0 0
        %821 = vmatprep.subr.bf16.mxu0 0
        %822 = vmatpush1.bf16.msra.mxu0 0
        %823 = vmatprep.subr.bf16.mxu0 0
        %824 = vmatpush1.bf16.msra.mxu0 0
        %825 = vmatprep.subr.bf16.mxu0 0
        %826 = vmatpush1.bf16.msra.mxu0 0
        %827 = vmatprep.subr.bf16.mxu0 0
        %828 = vmatpush1.bf16.msra.mxu0 0
        %829 = vmatprep.subr.bf16.mxu0 0
        %830 = vmatpush1.bf16.msra.mxu0 0
        %831 = vmatprep.subr.bf16.mxu0 0
        %832 = vmatpush1.bf16.msra.mxu0 0
        %833 = vmatprep.subr.bf16.mxu0 0
        %834 = vmatpush1.bf16.msra.mxu0 0
        %835 = vmatprep.subr.bf16.mxu0 0
        %836 = vmatpush1.bf16.msra.mxu0 0
        %837 = vmatprep.mubr.bf16.mxu0 0
        %838 = vmatmul.mubr.bf16.gmra.mrb[0].mxu0 %v699
        %v839 = vpop.f32.mrb[0].mxu0
        %v840 = vadd.f32 0.0, %v839
        %v841 = vpop.f32.mrb[0].mxu0
        %v842 = vpop.f32.mrb[0].mxu0
        %v843 = vpop.f32.mrb[0].mxu0
        %844 = vdwg.mxu0
        %v849 = vunpack.c.l.b16 %v682
        %v850 = vunpack.c.l.b16 %v683
        %v851 = vunpack.c.l.b16 %v684
        %v852 = vunpack.c.l.b16 %v685
        %v853 = vpack.c.b16 %v850, %v849
        %v854 = vpack.c.b16 %v852, %v851
        %857 = vmatprep.subr.bf16.mxu0 0
        %858 = vmatpush1.bf16.msra.mxu0 %v853
        %859 = vmatprep.subr.bf16.mxu0 0
        %860 = vmatpush1.bf16.msra.mxu0 %v854
        %861 = vmatprep.subr.bf16.mxu0 0
        %862 = vmatpush1.bf16.msra.mxu0 0
        %863 = vmatprep.subr.bf16.mxu0 0
        %864 = vmatpush1.bf16.msra.mxu0 0
        %865 = vmatprep.subr.bf16.mxu0 0
        %866 = vmatpush1.bf16.msra.mxu0 0
        %867 = vmatprep.subr.bf16.mxu0 0
        %868 = vmatpush1.bf16.msra.mxu0 0
        %869 = vmatprep.subr.bf16.mxu0 0
        %870 = vmatpush1.bf16.msra.mxu0 0
        %871 = vmatprep.subr.bf16.mxu0 0
        %872 = vmatpush1.bf16.msra.mxu0 0
        %873 = vmatprep.subr.bf16.mxu0 0
        %874 = vmatpush1.bf16.msra.mxu0 0
        %875 = vmatprep.subr.bf16.mxu0 0
        %876 = vmatpush1.bf16.msra.mxu0 0
        %877 = vmatprep.subr.bf16.mxu0 0
        %878 = vmatpush1.bf16.msra.mxu0 0
        %879 = vmatprep.subr.bf16.mxu0 0
        %880 = vmatpush1.bf16.msra.mxu0 0
        %881 = vmatprep.subr.bf16.mxu0 0
        %882 = vmatpush1.bf16.msra.mxu0 0
        %883 = vmatprep.subr.bf16.mxu0 0
        %884 = vmatpush1.bf16.msra.mxu0 0
        %885 = vmatprep.subr.bf16.mxu0 0
        %886 = vmatpush1.bf16.msra.mxu0 0
        %887 = vmatprep.subr.bf16.mxu0 0
        %888 = vmatpush1.bf16.msra.mxu0 0
        %889 = vmatprep.mubr.bf16.mxu0 0
        %890 = vmatmul.mubr.bf16.gmra.mrb[0].mxu0 %v699
        %v891 = vpop.f32.mrb[0].mxu0
        %v892 = vadd.f32 0.0, %v891
        %v893 = vpop.f32.mrb[0].mxu0
        %v894 = vpop.f32.mrb[0].mxu0
        %v895 = vpop.f32.mrb[0].mxu0
        %896 = vdwg.mxu0
        %v897 = vld [vmem:[%s613] sm:$0xf]
        %v898 = vld [vmem:[%s613 + $0x4] sm:$0xf]
        %v899 = vld [vmem:[%s613 + $0x8] sm:$0xf]
        %v900 = vld [vmem:[%s613 + $0xc] sm:$0xf]
        %v901 = vld [vmem:[%s613 + $0x10] sm:$0xf]
        %v902 = vld [vmem:[%s613 + $0x14] sm:$0xf]
        %v903 = vld [vmem:[%s613 + $0x18] sm:$0xf]
        %v904 = vld [vmem:[%s613 + $0x1c] sm:$0xf]
        %v905 = vld [vmem:[%s613 + $0x20] sm:$0xf]
        %v906 = vld [vmem:[%s613 + $0x24] sm:$0xf]
        %v907 = vld [vmem:[%s613 + $0x28] sm:$0xf]
        %v908 = vld [vmem:[%s613 + $0x2c] sm:$0xf]
        %v909 = vld [vmem:[%s613 + $0x30] sm:$0xf]
        %v910 = vld [vmem:[%s613 + $0x34] sm:$0xf]
        %v911 = vld [vmem:[%s613 + $0x38] sm:$0xf]
        %v912 = vld [vmem:[%s613 + $0x3c] sm:$0xf]
        %v917 = vunpack.c.l.b16 %v897
        %v918 = vunpack.c.l.b16 %v898
        %v919 = vunpack.c.l.b16 %v899
        %v920 = vunpack.c.l.b16 %v900
        %v921 = vpack.c.b16 %v918, %v917
        %v922 = vpack.c.b16 %v920, %v919
        %925 = vmatprep.subr.bf16.mxu0 0
        %926 = vmatpush1.bf16.msra.mxu0 %v921
        %927 = vmatprep.subr.bf16.mxu0 0
        %928 = vmatpush1.bf16.msra.mxu0 %v922
        %929 = vmatprep.subr.bf16.mxu0 0
        %930 = vmatpush1.bf16.msra.mxu0 0
        %931 = vmatprep.subr.bf16.mxu0 0
        %932 = vmatpush1.bf16.msra.mxu0 0
        %933 = vmatprep.subr.bf16.mxu0 0
        %934 = vmatpush1.bf16.msra.mxu0 0
        %935 = vmatprep.subr.bf16.mxu0 0
        %936 = vmatpush1.bf16.msra.mxu0 0
        %937 = vmatprep.subr.bf16.mxu0 0
        %938 = vmatpush1.bf16.msra.mxu0 0
        %939 = vmatprep.subr.bf16.mxu0 0
        %940 = vmatpush1.bf16.msra.mxu0 0
        %941 = vmatprep.subr.bf16.mxu0 0
        %942 = vmatpush1.bf16.msra.mxu0 0
        %943 = vmatprep.subr.bf16.mxu0 0
        %944 = vmatpush1.bf16.msra.mxu0 0
        %945 = vmatprep.subr.bf16.mxu0 0
        %946 = vmatpush1.bf16.msra.mxu0 0
        %947 = vmatprep.subr.bf16.mxu0 0
        %948 = vmatpush1.bf16.msra.mxu0 0
        %949 = vmatprep.subr.bf16.mxu0 0
        %950 = vmatpush1.bf16.msra.mxu0 0
        %951 = vmatprep.subr.bf16.mxu0 0
        %952 = vmatpush1.bf16.msra.mxu0 0
        %953 = vmatprep.subr.bf16.mxu0 0
        %954 = vmatpush1.bf16.msra.mxu0 0
        %955 = vmatprep.subr.bf16.mxu0 0
        %956 = vmatpush1.bf16.msra.mxu0 0
        %957 = vmatprep.mubr.bf16.mxu0 0
        %958 = vmatmul.mubr.bf16.gmra.mrb[0].mxu0 %v699
        %v959 = vpop.f32.mrb[0].mxu0
        %v960 = vadd.f32 0.0, %v959
        %v961 = vpop.f32.mrb[0].mxu0
        %v962 = vpop.f32.mrb[0].mxu0
        %v963 = vpop.f32.mrb[0].mxu0
        %964 = vdwg.mxu0
        %v969 = vunpack.c.l.b16 %v901
        %v970 = vunpack.c.l.b16 %v902
        %v971 = vunpack.c.l.b16 %v903
        %v972 = vunpack.c.l.b16 %v904
        %v973 = vpack.c.b16 %v970, %v969
        %v974 = vpack.c.b16 %v972, %v971
        %977 = vmatprep.subr.bf16.mxu0 0
        %978 = vmatpush1.bf16.msra.mxu0 %v973
        %979 = vmatprep.subr.bf16.mxu0 0
        %980 = vmatpush1.bf16.msra.mxu0 %v974
        %981 = vmatprep.subr.bf16.mxu0 0
        %982 = vmatpush1.bf16.msra.mxu0 0
        %983 = vmatprep.subr.bf16.mxu0 0
        %984 = vmatpush1.bf16.msra.mxu0 0
        %985 = vmatprep.subr.bf16.mxu0 0
        %986 = vmatpush1.bf16.msra.mxu0 0
        %987 = vmatprep.subr.bf16.mxu0 0
        %988 = vmatpush1.bf16.msra.mxu0 0
        %989 = vmatprep.subr.bf16.mxu0 0
        %990 = vmatpush1.bf16.msra.mxu0 0
        %991 = vmatprep.subr.bf16.mxu0 0
        %992 = vmatpush1.bf16.msra.mxu0 0
        %993 = vmatprep.subr.bf16.mxu0 0
        %994 = vmatpush1.bf16.msra.mxu0 0
        %995 = vmatprep.subr.bf16.mxu0 0
        %996 = vmatpush1.bf16.msra.mxu0 0
        %997 = vmatprep.subr.bf16.mxu0 0
        %998 = vmatpush1.bf16.msra.mxu0 0
        %999 = vmatprep.subr.bf16.mxu0 0
        %1000 = vmatpush1.bf16.msra.mxu0 0
        %1001 = vmatprep.subr.bf16.mxu0 0
        %1002 = vmatpush1.bf16.msra.mxu0 0
        %1003 = vmatprep.subr.bf16.mxu0 0
        %1004 = vmatpush1.bf16.msra.mxu0 0
        %1005 = vmatprep.subr.bf16.mxu0 0
        %1006 = vmatpush1.bf16.msra.mxu0 0
        %1007 = vmatprep.subr.bf16.mxu0 0
        %1008 = vmatpush1.bf16.msra.mxu0 0
        %1009 = vmatprep.mubr.bf16.mxu0 0
        %1010 = vmatmul.mubr.bf16.gmra.mrb[0].mxu0 %v699
        %v1011 = vpop.f32.mrb[0].mxu0
        %v1012 = vadd.f32 0.0, %v1011
        %v1013 = vpop.f32.mrb[0].mxu0
        %v1014 = vpop.f32.mrb[0].mxu0
        %v1015 = vpop.f32.mrb[0].mxu0
        %1016 = vdwg.mxu0
        %v1021 = vunpack.c.l.b16 %v905
        %v1022 = vunpack.c.l.b16 %v906
        %v1023 = vunpack.c.l.b16 %v907
        %v1024 = vunpack.c.l.b16 %v908
        %v1025 = vpack.c.b16 %v1022, %v1021
        %v1026 = vpack.c.b16 %v1024, %v1023
        %1029 = vmatprep.subr.bf16.mxu0 0
        %1030 = vmatpush1.bf16.msra.mxu0 %v1025
        %1031 = vmatprep.subr.bf16.mxu0 0
        %1032 = vmatpush1.bf16.msra.mxu0 %v1026
        %1033 = vmatprep.subr.bf16.mxu0 0
        %1034 = vmatpush1.bf16.msra.mxu0 0
        %1035 = vmatprep.subr.bf16.mxu0 0
        %1036 = vmatpush1.bf16.msra.mxu0 0
        %1037 = vmatprep.subr.bf16.mxu0 0
        %1038 = vmatpush1.bf16.msra.mxu0 0
        %1039 = vmatprep.subr.bf16.mxu0 0
        %1040 = vmatpush1.bf16.msra.mxu0 0
        %1041 = vmatprep.subr.bf16.mxu0 0
        %1042 = vmatpush1.bf16.msra.mxu0 0
        %1043 = vmatprep.subr.bf16.mxu0 0
        %1044 = vmatpush1.bf16.msra.mxu0 0
        %1045 = vmatprep.subr.bf16.mxu0 0
        %1046 = vmatpush1.bf16.msra.mxu0 0
        %1047 = vmatprep.subr.bf16.mxu0 0
        %1048 = vmatpush1.bf16.msra.mxu0 0
        %1049 = vmatprep.subr.bf16.mxu0 0
        %1050 = vmatpush1.bf16.msra.mxu0 0
        %1051 = vmatprep.subr.bf16.mxu0 0
        %1052 = vmatpush1.bf16.msra.mxu0 0
        %1053 = vmatprep.subr.bf16.mxu0 0
        %1054 = vmatpush1.bf16.msra.mxu0 0
        %1055 = vmatprep.subr.bf16.mxu0 0
        %1056 = vmatpush1.bf16.msra.mxu0 0
        %1057 = vmatprep.subr.bf16.mxu0 0
        %1058 = vmatpush1.bf16.msra.mxu0 0
        %1059 = vmatprep.subr.bf16.mxu0 0
        %1060 = vmatpush1.bf16.msra.mxu0 0
        %1061 = vmatprep.mubr.bf16.mxu0 0
        %1062 = vmatmul.mubr.bf16.gmra.mrb[0].mxu0 %v699
        %v1063 = vpop.f32.mrb[0].mxu0
        %v1064 = vadd.f32 0.0, %v1063
        %v1065 = vpop.f32.mrb[0].mxu0
        %v1066 = vpop.f32.mrb[0].mxu0
        %v1067 = vpop.f32.mrb[0].mxu0
        %1068 = vdwg.mxu0
        %v1073 = vunpack.c.l.b16 %v909
        %v1074 = vunpack.c.l.b16 %v910
        %v1075 = vunpack.c.l.b16 %v911
        %v1076 = vunpack.c.l.b16 %v912
        %v1077 = vpack.c.b16 %v1074, %v1073
        %v1078 = vpack.c.b16 %v1076, %v1075
        %1081 = vmatprep.subr.bf16.mxu0 0
        %1082 = vmatpush1.bf16.msra.mxu0 %v1077
        %1083 = vmatprep.subr.bf16.mxu0 0
        %1084 = vmatpush1.bf16.msra.mxu0 %v1078
        %1085 = vmatprep.subr.bf16.mxu0 0
        %1086 = vmatpush1.bf16.msra.mxu0 0
        %1087 = vmatprep.subr.bf16.mxu0 0
        %1088 = vmatpush1.bf16.msra.mxu0 0
        %1089 = vmatprep.subr.bf16.mxu0 0
        %1090 = vmatpush1.bf16.msra.mxu0 0
        %1091 = vmatprep.subr.bf16.mxu0 0
        %1092 = vmatpush1.bf16.msra.mxu0 0
        %1093 = vmatprep.subr.bf16.mxu0 0
        %1094 = vmatpush1.bf16.msra.mxu0 0
        %1095 = vmatprep.subr.bf16.mxu0 0
        %1096 = vmatpush1.bf16.msra.mxu0 0
        %1097 = vmatprep.subr.bf16.mxu0 0
        %1098 = vmatpush1.bf16.msra.mxu0 0
        %1099 = vmatprep.subr.bf16.mxu0 0
        %1100 = vmatpush1.bf16.msra.mxu0 0
        %1101 = vmatprep.subr.bf16.mxu0 0
        %1102 = vmatpush1.bf16.msra.mxu0 0
        %1103 = vmatprep.subr.bf16.mxu0 0
        %1104 = vmatpush1.bf16.msra.mxu0 0
        %1105 = vmatprep.subr.bf16.mxu0 0
        %1106 = vmatpush1.bf16.msra.mxu0 0
        %1107 = vmatprep.subr.bf16.mxu0 0
        %1108 = vmatpush1.bf16.msra.mxu0 0
        %1109 = vmatprep.subr.bf16.mxu0 0
        %1110 = vmatpush1.bf16.msra.mxu0 0
        %1111 = vmatprep.subr.bf16.mxu0 0
        %1112 = vmatpush1.bf16.msra.mxu0 0
        %1113 = vmatprep.mubr.bf16.mxu0 0
        %1114 = vmatmul.mubr.bf16.gmra.mrb[0].mxu0 %v699
        %v1115 = vpop.f32.mrb[0].mxu0
        %v1116 = vadd.f32 0.0, %v1115
        %v1117 = vpop.f32.mrb[0].mxu0
        %v1118 = vpop.f32.mrb[0].mxu0
        %v1119 = vpop.f32.mrb[0].mxu0
        %1120 = vdwg.mxu0
        %v1121 = vld [vmem:[%s618] sm:$0xf]
        %v1122 = vld [vmem:[%s618 + $0x4] sm:$0xf]
        %v1123 = vld [vmem:[%s618 + $0x8] sm:$0xf]
        %v1124 = vld [vmem:[%s618 + $0xc] sm:$0xf]
        %v1125 = vld [vmem:[%s618 + $0x10] sm:$0xf]
        %v1126 = vld [vmem:[%s618 + $0x14] sm:$0xf]
        %v1127 = vld [vmem:[%s618 + $0x18] sm:$0xf]
        %v1128 = vld [vmem:[%s618 + $0x1c] sm:$0xf]
        %v1129 = vld [vmem:[%s618 + $0x20] sm:$0xf]
        %v1130 = vld [vmem:[%s618 + $0x24] sm:$0xf]
        %v1131 = vld [vmem:[%s618 + $0x28] sm:$0xf]
        %v1132 = vld [vmem:[%s618 + $0x2c] sm:$0xf]
        %v1133 = vld [vmem:[%s618 + $0x30] sm:$0xf]
        %v1134 = vld [vmem:[%s618 + $0x34] sm:$0xf]
        %v1135 = vld [vmem:[%s618 + $0x38] sm:$0xf]
        %v1136 = vld [vmem:[%s618 + $0x3c] sm:$0xf]
        %v1141 = vunpack.c.l.b16 %v1121
        %v1142 = vunpack.c.l.b16 %v1122
        %v1143 = vunpack.c.l.b16 %v1123
        %v1144 = vunpack.c.l.b16 %v1124
        %v1145 = vpack.c.b16 %v1142, %v1141
        %v1146 = vpack.c.b16 %v1144, %v1143
        %1149 = vmatprep.subr.bf16.mxu0 0
        %1150 = vmatpush1.bf16.msra.mxu0 %v1145
        %1151 = vmatprep.subr.bf16.mxu0 0
        %1152 = vmatpush1.bf16.msra.mxu0 %v1146
        %1153 = vmatprep.subr.bf16.mxu0 0
        %1154 = vmatpush1.bf16.msra.mxu0 0
        %1155 = vmatprep.subr.bf16.mxu0 0
        %1156 = vmatpush1.bf16.msra.mxu0 0
        %1157 = vmatprep.subr.bf16.mxu0 0
        %1158 = vmatpush1.bf16.msra.mxu0 0
        %1159 = vmatprep.subr.bf16.mxu0 0
        %1160 = vmatpush1.bf16.msra.mxu0 0
        %1161 = vmatprep.subr.bf16.mxu0 0
        %1162 = vmatpush1.bf16.msra.mxu0 0
        %1163 = vmatprep.subr.bf16.mxu0 0
        %1164 = vmatpush1.bf16.msra.mxu0 0
        %1165 = vmatprep.subr.bf16.mxu0 0
        %1166 = vmatpush1.bf16.msra.mxu0 0
        %1167 = vmatprep.subr.bf16.mxu0 0
        %1168 = vmatpush1.bf16.msra.mxu0 0
        %1169 = vmatprep.subr.bf16.mxu0 0
        %1170 = vmatpush1.bf16.msra.mxu0 0
        %1171 = vmatprep.subr.bf16.mxu0 0
        %1172 = vmatpush1.bf16.msra.mxu0 0
        %1173 = vmatprep.subr.bf16.mxu0 0
        %1174 = vmatpush1.bf16.msra.mxu0 0
        %1175 = vmatprep.subr.bf16.mxu0 0
        %1176 = vmatpush1.bf16.msra.mxu0 0
        %1177 = vmatprep.subr.bf16.mxu0 0
        %1178 = vmatpush1.bf16.msra.mxu0 0
        %1179 = vmatprep.subr.bf16.mxu0 0
        %1180 = vmatpush1.bf16.msra.mxu0 0
        %1181 = vmatprep.mubr.bf16.mxu0 0
        %1182 = vmatmul.mubr.bf16.gmra.mrb[0].mxu0 %v699
        %v1183 = vpop.f32.mrb[0].mxu0
        %v1184 = vadd.f32 0.0, %v1183
        %v1185 = vpop.f32.mrb[0].mxu0
        %v1186 = vpop.f32.mrb[0].mxu0
        %v1187 = vpop.f32.mrb[0].mxu0
        %1188 = vdwg.mxu0
        %v1193 = vunpack.c.l.b16 %v1125
        %v1194 = vunpack.c.l.b16 %v1126
        %v1195 = vunpack.c.l.b16 %v1127
        %v1196 = vunpack.c.l.b16 %v1128
        %v1197 = vpack.c.b16 %v1194, %v1193
        %v1198 = vpack.c.b16 %v1196, %v1195
        %1201 = vmatprep.subr.bf16.mxu0 0
        %1202 = vmatpush1.bf16.msra.mxu0 %v1197
        %1203 = vmatprep.subr.bf16.mxu0 0
        %1204 = vmatpush1.bf16.msra.mxu0 %v1198
        %1205 = vmatprep.subr.bf16.mxu0 0
        %1206 = vmatpush1.bf16.msra.mxu0 0
        %1207 = vmatprep.subr.bf16.mxu0 0
        %1208 = vmatpush1.bf16.msra.mxu0 0
        %1209 = vmatprep.subr.bf16.mxu0 0
        %1210 = vmatpush1.bf16.msra.mxu0 0
        %1211 = vmatprep.subr.bf16.mxu0 0
        %1212 = vmatpush1.bf16.msra.mxu0 0
        %1213 = vmatprep.subr.bf16.mxu0 0
        %1214 = vmatpush1.bf16.msra.mxu0 0
        %1215 = vmatprep.subr.bf16.mxu0 0
        %1216 = vmatpush1.bf16.msra.mxu0 0
        %1217 = vmatprep.subr.bf16.mxu0 0
        %1218 = vmatpush1.bf16.msra.mxu0 0
        %1219 = vmatprep.subr.bf16.mxu0 0
        %1220 = vmatpush1.bf16.msra.mxu0 0
        %1221 = vmatprep.subr.bf16.mxu0 0
        %1222 = vmatpush1.bf16.msra.mxu0 0
        %1223 = vmatprep.subr.bf16.mxu0 0
        %1224 = vmatpush1.bf16.msra.mxu0 0
        %1225 = vmatprep.subr.bf16.mxu0 0
        %1226 = vmatpush1.bf16.msra.mxu0 0
        %1227 = vmatprep.subr.bf16.mxu0 0
        %1228 = vmatpush1.bf16.msra.mxu0 0
        %1229 = vmatprep.subr.bf16.mxu0 0
        %1230 = vmatpush1.bf16.msra.mxu0 0
        %1231 = vmatprep.subr.bf16.mxu0 0
        %1232 = vmatpush1.bf16.msra.mxu0 0
        %1233 = vmatprep.mubr.bf16.mxu0 0
        %1234 = vmatmul.mubr.bf16.gmra.mrb[0].mxu0 %v699
        %v1235 = vpop.f32.mrb[0].mxu0
        %v1236 = vadd.f32 0.0, %v1235
        %v1237 = vpop.f32.mrb[0].mxu0
        %v1238 = vpop.f32.mrb[0].mxu0
        %v1239 = vpop.f32.mrb[0].mxu0
        %1240 = vdwg.mxu0
        %v1245 = vunpack.c.l.b16 %v1129
        %v1246 = vunpack.c.l.b16 %v1130
        %v1247 = vunpack.c.l.b16 %v1131
        %v1248 = vunpack.c.l.b16 %v1132
        %v1249 = vpack.c.b16 %v1246, %v1245
        %v1250 = vpack.c.b16 %v1248, %v1247
        %1253 = vmatprep.subr.bf16.mxu0 0
        %1254 = vmatpush1.bf16.msra.mxu0 %v1249
        %1255 = vmatprep.subr.bf16.mxu0 0
        %1256 = vmatpush1.bf16.msra.mxu0 %v1250
        %1257 = vmatprep.subr.bf16.mxu0 0
        %1258 = vmatpush1.bf16.msra.mxu0 0
        %1259 = vmatprep.subr.bf16.mxu0 0
        %1260 = vmatpush1.bf16.msra.mxu0 0
        %1261 = vmatprep.subr.bf16.mxu0 0
        %1262 = vmatpush1.bf16.msra.mxu0 0
        %1263 = vmatprep.subr.bf16.mxu0 0
        %1264 = vmatpush1.bf16.msra.mxu0 0
        %1265 = vmatprep.subr.bf16.mxu0 0
        %1266 = vmatpush1.bf16.msra.mxu0 0
        %1267 = vmatprep.subr.bf16.mxu0 0
        %1268 = vmatpush1.bf16.msra.mxu0 0
        %1269 = vmatprep.subr.bf16.mxu0 0
        %1270 = vmatpush1.bf16.msra.mxu0 0
        %1271 = vmatprep.subr.bf16.mxu0 0
        %1272 = vmatpush1.bf16.msra.mxu0 0
        %1273 = vmatprep.subr.bf16.mxu0 0
        %1274 = vmatpush1.bf16.msra.mxu0 0
        %1275 = vmatprep.subr.bf16.mxu0 0
        %1276 = vmatpush1.bf16.msra.mxu0 0
        %1277 = vmatprep.subr.bf16.mxu0 0
        %1278 = vmatpush1.bf16.msra.mxu0 0
        %1279 = vmatprep.subr.bf16.mxu0 0
        %1280 = vmatpush1.bf16.msra.mxu0 0
        %1281 = vmatprep.subr.bf16.mxu0 0
        %1282 = vmatpush1.bf16.msra.mxu0 0
        %1283 = vmatprep.subr.bf16.mxu0 0
        %1284 = vmatpush1.bf16.msra.mxu0 0
        %1285 = vmatprep.mubr.bf16.mxu0 0
        %1286 = vmatmul.mubr.bf16.gmra.mrb[0].mxu0 %v699
        %v1287 = vpop.f32.mrb[0].mxu0
        %v1288 = vadd.f32 0.0, %v1287
        %v1289 = vpop.f32.mrb[0].mxu0
        %v1290 = vpop.f32.mrb[0].mxu0
        %v1291 = vpop.f32.mrb[0].mxu0
        %1292 = vdwg.mxu0
        %v1297 = vunpack.c.l.b16 %v1133
        %v1298 = vunpack.c.l.b16 %v1134
        %v1299 = vunpack.c.l.b16 %v1135
        %v1300 = vunpack.c.l.b16 %v1136
        %v1301 = vpack.c.b16 %v1298, %v1297
        %v1302 = vpack.c.b16 %v1300, %v1299
        %1305 = vmatprep.subr.bf16.mxu0 0
        %1306 = vmatpush1.bf16.msra.mxu0 %v1301
        %1307 = vmatprep.subr.bf16.mxu0 0
        %1308 = vmatpush1.bf16.msra.mxu0 %v1302
        %1309 = vmatprep.subr.bf16.mxu0 0
        %1310 = vmatpush1.bf16.msra.mxu0 0
        %1311 = vmatprep.subr.bf16.mxu0 0
        %1312 = vmatpush1.bf16.msra.mxu0 0
        %1313 = vmatprep.subr.bf16.mxu0 0
        %1314 = vmatpush1.bf16.msra.mxu0 0
        %1315 = vmatprep.subr.bf16.mxu0 0
        %1316 = vmatpush1.bf16.msra.mxu0 0
        %1317 = vmatprep.subr.bf16.mxu0 0
        %1318 = vmatpush1.bf16.msra.mxu0 0
        %1319 = vmatprep.subr.bf16.mxu0 0
        %1320 = vmatpush1.bf16.msra.mxu0 0
        %1321 = vmatprep.subr.bf16.mxu0 0
        %1322 = vmatpush1.bf16.msra.mxu0 0
        %1323 = vmatprep.subr.bf16.mxu0 0
        %1324 = vmatpush1.bf16.msra.mxu0 0
        %1325 = vmatprep.subr.bf16.mxu0 0
        %1326 = vmatpush1.bf16.msra.mxu0 0
        %1327 = vmatprep.subr.bf16.mxu0 0
        %1328 = vmatpush1.bf16.msra.mxu0 0
        %1329 = vmatprep.subr.bf16.mxu0 0
        %1330 = vmatpush1.bf16.msra.mxu0 0
        %1331 = vmatprep.subr.bf16.mxu0 0
        %1332 = vmatpush1.bf16.msra.mxu0 0
        %1333 = vmatprep.subr.bf16.mxu0 0
        %1334 = vmatpush1.bf16.msra.mxu0 0
        %1335 = vmatprep.subr.bf16.mxu0 0
        %1336 = vmatpush1.bf16.msra.mxu0 0
        %1337 = vmatprep.mubr.bf16.mxu0 0
        %1338 = vmatmul.mubr.bf16.gmra.mrb[0].mxu0 %v699
        %v1339 = vpop.f32.mrb[0].mxu0
        %v1340 = vadd.f32 0.0, %v1339
        %v1341 = vpop.f32.mrb[0].mxu0
        %v1342 = vpop.f32.mrb[0].mxu0
        %v1343 = vpop.f32.mrb[0].mxu0
        %1344 = vdwg.mxu0
        %v1345 = vld [vmem:[%s10] sm:$0xff]
        %v1346 = vld [vmem:[%s11] sm:$0xff]
        %v1347 = vmul.f32 %v736, %v1345
        %v1348 = vmul.f32 %v788, %v1345
        %v1349 = vmul.f32 %v840, %v1345
        %v1350 = vmul.f32 %v892, %v1345
        %1352 = vrot.lane.b32.xlu0 %v1346, 4
        %v1353 = vpop.permute.xlu0 %1352
        %v1355 = vmul.f32 %v736, %v1353
        %v1356 = vmul.f32 %v788, %v1353
        %v1357 = vmul.f32 %v840, %v1353
        %v1358 = vmul.f32 %v892, %v1353
        %1363 = vrot.lane.b32.xlu0 %v1355, 124
        %v1364 = vpop.permute.xlu0 %1363
        %1365 = vrot.lane.b32.xlu0 %v1356, 124
        %v1366 = vpop.permute.xlu0 %1365
        %1367 = vrot.lane.b32.xlu0 %v1357, 124
        %v1368 = vpop.permute.xlu0 %1367
        %1369 = vrot.lane.b32.xlu0 %v1358, 124
        %v1370 = vpop.permute.xlu0 %1369
        %v1375 = vsub.f32 %v1347, %v1364
        %v1376 = vsub.f32 %v1348, %v1366
        %v1377 = vsub.f32 %v1349, %v1368
        %v1378 = vsub.f32 %v1350, %v1370
        %v1379 = vmul.f32 %v736, %v1346
        %v1380 = vmul.f32 %v788, %v1346
        %v1381 = vmul.f32 %v840, %v1346
        %v1382 = vmul.f32 %v892, %v1346
        %1384 = vrot.lane.b32.xlu0 %v1345, 4
        %v1385 = vpop.permute.xlu0 %1384
        %v1387 = vmul.f32 %v736, %v1385
        %v1388 = vmul.f32 %v788, %v1385
        %v1389 = vmul.f32 %v840, %v1385
        %v1390 = vmul.f32 %v892, %v1385
        %1395 = vrot.lane.b32.xlu0 %v1387, 124
        %v1396 = vpop.permute.xlu0 %1395
        %1397 = vrot.lane.b32.xlu0 %v1388, 124
        %v1398 = vpop.permute.xlu0 %1397
        %1399 = vrot.lane.b32.xlu0 %v1389, 124
        %v1400 = vpop.permute.xlu0 %1399
        %1401 = vrot.lane.b32.xlu0 %v1390, 124
        %v1402 = vpop.permute.xlu0 %1401
        %v1407 = vadd.f32 %v1379, %v1396
        %v1408 = vadd.f32 %v1380, %v1398
        %v1409 = vadd.f32 %v1381, %v1400
        %v1410 = vadd.f32 %v1382, %v1402
        %1415 = vrot.lane.b32.xlu0 %v1407, 4
        %v1416 = vpop.permute.xlu0 %1415
        %1417 = vrot.lane.b32.xlu0 %v1408, 4
        %v1418 = vpop.permute.xlu0 %1417
        %1419 = vrot.lane.b32.xlu0 %v1409, 4
        %v1420 = vpop.permute.xlu0 %1419
        %1421 = vrot.lane.b32.xlu0 %v1410, 4
        %v1422 = vpop.permute.xlu0 %1421
        %vm1427 = vcmask 31744
        %v1428 = vsel %vm1427, %v1375, %v1416
        %v1429 = vsel %vm1427, %v1376, %v1418
        %v1430 = vsel %vm1427, %v1377, %v1420
        %v1431 = vsel %vm1427, %v1378, %v1422
        %v1432 = vmul.f32 %v960, %v1345
        %v1433 = vmul.f32 %v1012, %v1345
        %v1434 = vmul.f32 %v1064, %v1345
        %v1435 = vmul.f32 %v1116, %v1345
        %v1436 = vmul.f32 %v960, %v1353
        %v1437 = vmul.f32 %v1012, %v1353
        %v1438 = vmul.f32 %v1064, %v1353
        %v1439 = vmul.f32 %v1116, %v1353
        %1444 = vrot.lane.b32.xlu0 %v1436, 124
        %v1445 = vpop.permute.xlu0 %1444
        %1446 = vrot.lane.b32.xlu0 %v1437, 124
        %v1447 = vpop.permute.xlu0 %1446
        %1448 = vrot.lane.b32.xlu0 %v1438, 124
        %v1449 = vpop.permute.xlu0 %1448
        %1450 = vrot.lane.b32.xlu0 %v1439, 124
        %v1451 = vpop.permute.xlu0 %1450
        %v1456 = vsub.f32 %v1432, %v1445
        %v1457 = vsub.f32 %v1433, %v1447
        %v1458 = vsub.f32 %v1434, %v1449
        %v1459 = vsub.f32 %v1435, %v1451
        %v1460 = vmul.f32 %v960, %v1346
        %v1461 = vmul.f32 %v1012, %v1346
        %v1462 = vmul.f32 %v1064, %v1346
        %v1463 = vmul.f32 %v1116, %v1346
        %v1464 = vmul.f32 %v960, %v1385
        %v1465 = vmul.f32 %v1012, %v1385
        %v1466 = vmul.f32 %v1064, %v1385
        %v1467 = vmul.f32 %v1116, %v1385
        %1472 = vrot.lane.b32.xlu0 %v1464, 124
        %v1473 = vpop.permute.xlu0 %1472
        %1474 = vrot.lane.b32.xlu0 %v1465, 124
        %v1475 = vpop.permute.xlu0 %1474
        %1476 = vrot.lane.b32.xlu0 %v1466, 124
        %v1477 = vpop.permute.xlu0 %1476
        %1478 = vrot.lane.b32.xlu0 %v1467, 124
        %v1479 = vpop.permute.xlu0 %1478
        %v1484 = vadd.f32 %v1460, %v1473
        %v1485 = vadd.f32 %v1461, %v1475
        %v1486 = vadd.f32 %v1462, %v1477
        %v1487 = vadd.f32 %v1463, %v1479
        %1492 = vrot.lane.b32.xlu0 %v1484, 4
        %v1493 = vpop.permute.xlu0 %1492
        %1494 = vrot.lane.b32.xlu0 %v1485, 4
        %v1495 = vpop.permute.xlu0 %1494
        %1496 = vrot.lane.b32.xlu0 %v1486, 4
        %v1497 = vpop.permute.xlu0 %1496
        %1498 = vrot.lane.b32.xlu0 %v1487, 4
        %v1499 = vpop.permute.xlu0 %1498
        %v1504 = vsel %vm1427, %v1456, %v1493
        %v1505 = vsel %vm1427, %v1457, %v1495
        %v1506 = vsel %vm1427, %v1458, %v1497
        %v1507 = vsel %vm1427, %v1459, %v1499
        %v1508 = vlaneseq
        %v1509 = vshrl.u32 %v1508, 7
        %v1510 = vlaneseq
        %v1511 = vand.u32 %v1510, 127
        %vm1512 = vcmp.ge.s32.totalorder %v1509, %v1511
        %v1513 = vpack.c.bf16 %v1428, %v1428
        %v1514 = vpack.c.bf16 %v1429, %v1429
        %v1515 = vpack.c.bf16 %v1430, %v1430
        %v1516 = vpack.c.bf16 %v1431, %v1431
        %v1517 = vpack.c.bf16 %v1504, %v1504
        %v1518 = vpack.c.bf16 %v1505, %v1505
        %v1519 = vpack.c.bf16 %v1506, %v1506
        %v1520 = vpack.c.bf16 %v1507, %v1507
        %vm1521 = vcmask 64512
        %v1523 = vsel %vm1521, %v1513, 0
        %v1526 = vsel %vm1521, %v1517, 0
        %1528 = vmatprep.subr.bf16.mxu0 0
        %1529 = vmatpush1.bf16.xpose.msra.mxu0 %v1526
        %1530 = vmatprep.subr.bf16.mxu0 0
        %1531 = vmatpush1.bf16.xpose.msra.mxu0 0
        %1532 = vmatprep.subr.bf16.mxu0 0
        %1533 = vmatpush1.bf16.xpose.msra.mxu0 0
        %1534 = vmatprep.subr.bf16.mxu0 0
        %1535 = vmatpush1.bf16.xpose.msra.mxu0 0
        %1536 = vmatprep.subr.bf16.mxu0 0
        %1537 = vmatpush1.bf16.xpose.msra.mxu0 0
        %1538 = vmatprep.subr.bf16.mxu0 0
        %1539 = vmatpush1.bf16.xpose.msra.mxu0 0
        %1540 = vmatprep.subr.bf16.mxu0 0
        %1541 = vmatpush1.bf16.xpose.msra.mxu0 0
        %1542 = vmatprep.subr.bf16.mxu0 0
        %1543 = vmatpush1.bf16.xpose.msra.mxu0 0
        %1544 = vmatprep.subr.bf16.mxu0 0
        %1545 = vmatpush1.bf16.xpose.msra.mxu0 0
        %1546 = vmatprep.subr.bf16.mxu0 0
        %1547 = vmatpush1.bf16.xpose.msra.mxu0 0
        %1548 = vmatprep.subr.bf16.mxu0 0
        %1549 = vmatpush1.bf16.xpose.msra.mxu0 0
        %1550 = vmatprep.subr.bf16.mxu0 0
        %1551 = vmatpush1.bf16.xpose.msra.mxu0 0
        %1552 = vmatprep.subr.bf16.mxu0 0
        %1553 = vmatpush1.bf16.xpose.msra.mxu0 0
        %1554 = vmatprep.subr.bf16.mxu0 0
        %1555 = vmatpush1.bf16.xpose.msra.mxu0 0
        %1556 = vmatprep.subr.bf16.mxu0 0
        %1557 = vmatpush1.bf16.xpose.msra.mxu0 0
        %1558 = vmatprep.subr.bf16.mxu0 0
        %1559 = vmatpush1.bf16.xpose.msra.mxu0 0
        %1560 = vmatprep.mubr.bf16.mxu0 0
        %1561 = vmatmul.mubr.bf16.gmra.mrb[0].mxu0 %v1523
        %v1562 = vpop.f32.mrb[0].mxu0
        %v1563 = vadd.f32 0.0, %v1562
        %v1564 = vpop.f32.mrb[0].mxu0
        %v1565 = vpop.f32.mrb[0].mxu0
        %v1566 = vpop.f32.mrb[0].mxu0
        %1567 = vdwg.mxu0
        %v1569 = vsel %vm1521, %v1514, 0
        %v1572 = vsel %vm1521, %v1518, 0
        %1574 = vmatprep.subr.bf16.mxu0 0
        %1575 = vmatpush1.bf16.xpose.msra.mxu0 %v1572
        %1576 = vmatprep.subr.bf16.mxu0 0
        %1577 = vmatpush1.bf16.xpose.msra.mxu0 0
        %1578 = vmatprep.subr.bf16.mxu0 0
        %1579 = vmatpush1.bf16.xpose.msra.mxu0 0
        %1580 = vmatprep.subr.bf16.mxu0 0
        %1581 = vmatpush1.bf16.xpose.msra.mxu0 0
        %1582 = vmatprep.subr.bf16.mxu0 0
        %1583 = vmatpush1.bf16.xpose.msra.mxu0 0
        %1584 = vmatprep.subr.bf16.mxu0 0
        %1585 = vmatpush1.bf16.xpose.msra.mxu0 0
        %1586 = vmatprep.subr.bf16.mxu0 0
        %1587 = vmatpush1.bf16.xpose.msra.mxu0 0
        %1588 = vmatprep.subr.bf16.mxu0 0
        %1589 = vmatpush1.bf16.xpose.msra.mxu0 0
        %1590 = vmatprep.subr.bf16.mxu0 0
        %1591 = vmatpush1.bf16.xpose.msra.mxu0 0
        %1592 = vmatprep.subr.bf16.mxu0 0
        %1593 = vmatpush1.bf16.xpose.msra.mxu0 0
        %1594 = vmatprep.subr.bf16.mxu0 0
        %1595 = vmatpush1.bf16.xpose.msra.mxu0 0
        %1596 = vmatprep.subr.bf16.mxu0 0
        %1597 = vmatpush1.bf16.xpose.msra.mxu0 0
        %1598 = vmatprep.subr.bf16.mxu0 0
        %1599 = vmatpush1.bf16.xpose.msra.mxu0 0
        %1600 = vmatprep.subr.bf16.mxu0 0
        %1601 = vmatpush1.bf16.xpose.msra.mxu0 0
        %1602 = vmatprep.subr.bf16.mxu0 0
        %1603 = vmatpush1.bf16.xpose.msra.mxu0 0
        %1604 = vmatprep.subr.bf16.mxu0 0
        %1605 = vmatpush1.bf16.xpose.msra.mxu0 0
        %1606 = vmatprep.mubr.bf16.mxu0 0
        %1607 = vmatmul.mubr.bf16.gmra.mrb[0].mxu0 %v1569
        %v1608 = vpop.f32.mrb[0].mxu0
        %v1609 = vadd.f32 0.0, %v1608
        %v1610 = vpop.f32.mrb[0].mxu0
        %v1611 = vpop.f32.mrb[0].mxu0
        %v1612 = vpop.f32.mrb[0].mxu0
        %1613 = vdwg.mxu0
        %v1615 = vsel %vm1521, %v1515, 0
        %v1618 = vsel %vm1521, %v1519, 0
        %1620 = vmatprep.subr.bf16.mxu0 0
        %1621 = vmatpush1.bf16.xpose.msra.mxu0 %v1618
        %1622 = vmatprep.subr.bf16.mxu0 0
        %1623 = vmatpush1.bf16.xpose.msra.mxu0 0
        %1624 = vmatprep.subr.bf16.mxu0 0
        %1625 = vmatpush1.bf16.xpose.msra.mxu0 0
        %1626 = vmatprep.subr.bf16.mxu0 0
        %1627 = vmatpush1.bf16.xpose.msra.mxu0 0
        %1628 = vmatprep.subr.bf16.mxu0 0
        %1629 = vmatpush1.bf16.xpose.msra.mxu0 0
        %1630 = vmatprep.subr.bf16.mxu0 0
        %1631 = vmatpush1.bf16.xpose.msra.mxu0 0
        %1632 = vmatprep.subr.bf16.mxu0 0
        %1633 = vmatpush1.bf16.xpose.msra.mxu0 0
        %1634 = vmatprep.subr.bf16.mxu0 0
        %1635 = vmatpush1.bf16.xpose.msra.mxu0 0
        %1636 = vmatprep.subr.bf16.mxu0 0
        %1637 = vmatpush1.bf16.xpose.msra.mxu0 0
        %1638 = vmatprep.subr.bf16.mxu0 0
        %1639 = vmatpush1.bf16.xpose.msra.mxu0 0
        %1640 = vmatprep.subr.bf16.mxu0 0
        %1641 = vmatpush1.bf16.xpose.msra.mxu0 0
        %1642 = vmatprep.subr.bf16.mxu0 0
        %1643 = vmatpush1.bf16.xpose.msra.mxu0 0
        %1644 = vmatprep.subr.bf16.mxu0 0
        %1645 = vmatpush1.bf16.xpose.msra.mxu0 0
        %1646 = vmatprep.subr.bf16.mxu0 0
        %1647 = vmatpush1.bf16.xpose.msra.mxu0 0
        %1648 = vmatprep.subr.bf16.mxu0 0
        %1649 = vmatpush1.bf16.xpose.msra.mxu0 0
        %1650 = vmatprep.subr.bf16.mxu0 0
        %1651 = vmatpush1.bf16.xpose.msra.mxu0 0
        %1652 = vmatprep.mubr.bf16.mxu0 0
        %1653 = vmatmul.mubr.bf16.gmra.mrb[0].mxu0 %v1615
        %v1654 = vpop.f32.mrb[0].mxu0
        %v1655 = vadd.f32 0.0, %v1654
        %v1656 = vpop.f32.mrb[0].mxu0
        %v1657 = vpop.f32.mrb[0].mxu0
        %v1658 = vpop.f32.mrb[0].mxu0
        %1659 = vdwg.mxu0
        %v1661 = vsel %vm1521, %v1516, 0
        %v1664 = vsel %vm1521, %v1520, 0
        %1666 = vmatprep.subr.bf16.mxu0 0
        %1667 = vmatpush1.bf16.xpose.msra.mxu0 %v1664
        %1668 = vmatprep.subr.bf16.mxu0 0
        %1669 = vmatpush1.bf16.xpose.msra.mxu0 0
        %1670 = vmatprep.subr.bf16.mxu0 0
        %1671 = vmatpush1.bf16.xpose.msra.mxu0 0
        %1672 = vmatprep.subr.bf16.mxu0 0
        %1673 = vmatpush1.bf16.xpose.msra.mxu0 0
        %1674 = vmatprep.subr.bf16.mxu0 0
        %1675 = vmatpush1.bf16.xpose.msra.mxu0 0
        %1676 = vmatprep.subr.bf16.mxu0 0
        %1677 = vmatpush1.bf16.xpose.msra.mxu0 0
        %1678 = vmatprep.subr.bf16.mxu0 0
        %1679 = vmatpush1.bf16.xpose.msra.mxu0 0
        %1680 = vmatprep.subr.bf16.mxu0 0
        %1681 = vmatpush1.bf16.xpose.msra.mxu0 0
        %1682 = vmatprep.subr.bf16.mxu0 0
        %1683 = vmatpush1.bf16.xpose.msra.mxu0 0
        %1684 = vmatprep.subr.bf16.mxu0 0
        %1685 = vmatpush1.bf16.xpose.msra.mxu0 0
        %1686 = vmatprep.subr.bf16.mxu0 0
        %1687 = vmatpush1.bf16.xpose.msra.mxu0 0
        %1688 = vmatprep.subr.bf16.mxu0 0
        %1689 = vmatpush1.bf16.xpose.msra.mxu0 0
        %1690 = vmatprep.subr.bf16.mxu0 0
        %1691 = vmatpush1.bf16.xpose.msra.mxu0 0
        %1692 = vmatprep.subr.bf16.mxu0 0
        %1693 = vmatpush1.bf16.xpose.msra.mxu0 0
        %1694 = vmatprep.subr.bf16.mxu0 0
        %1695 = vmatpush1.bf16.xpose.msra.mxu0 0
        %1696 = vmatprep.subr.bf16.mxu0 0
        %1697 = vmatpush1.bf16.xpose.msra.mxu0 0
        %1698 = vmatprep.mubr.bf16.mxu0 0
        %1699 = vmatmul.mubr.bf16.gmra.mrb[0].mxu0 %v1661
        %v1700 = vpop.f32.mrb[0].mxu0
        %v1701 = vadd.f32 0.0, %v1700
        %v1702 = vpop.f32.mrb[0].mxu0
        %v1703 = vpop.f32.mrb[0].mxu0
        %v1704 = vpop.f32.mrb[0].mxu0
        %1705 = vdwg.mxu0
        %v1706 = vmul.f32 %v1563, 0.35355338
        %v1707 = vmul.f32 %v1609, 0.35355338
        %v1708 = vmul.f32 %v1655, 0.35355338
        %v1709 = vmul.f32 %v1701, 0.35355338
        %v1710 = vsel %vm1512, 1, 0
        %vm1711 = vcmp.eq.s32.totalorder %v1710, 1
        %v1712 = vsel %vm1711, %v1706, -inf
        %v1713 = vsel %vm1711, %v1707, -inf
        %v1714 = vsel %vm1711, %v1708, -inf
        %v1715 = vsel %vm1711, %v1709, -inf
        %v1716 = vsel %vm1521, %v1712, -inf
        %1717 = vmax.xlane.f32.xlu0 %v1716
        %v1718 = vpop.xlane.xlu0 %1717
        %v1719 = vsel %vm1521, %v1713, -inf
        %1720 = vmax.xlane.f32.xlu0 %v1719
        %v1721 = vpop.xlane.xlu0 %1720
        %v1722 = vsel %vm1521, %v1714, -inf
        %1723 = vmax.xlane.f32.xlu0 %v1722
        %v1724 = vpop.xlane.xlu0 %1723
        %v1725 = vsel %vm1521, %v1715, -inf
        %1726 = vmax.xlane.f32.xlu0 %v1725
        %v1727 = vpop.xlane.xlu0 %1726
        %v1728 = vsub.f32 %v1712, %v1718
        %v1729 = vsub.f32 %v1713, %v1721
        %v1730 = vsub.f32 %v1714, %v1724
        %v1731 = vsub.f32 %v1715, %v1727
        %v1732 = vmul.f32 %v1728, 1.442695
        %v1733 = vpow.pop %v1732
        %v1734 = vmul.f32 %v1729, 1.442695
        %v1735 = vpow.pop %v1734
        %v1736 = vmul.f32 %v1730, 1.442695
        %v1737 = vpow.pop %v1736
        %v1738 = vmul.f32 %v1731, 1.442695
        %v1739 = vpow.pop %v1738
        %v1740 = vsel %vm1521, %v1733, 0.0
        %1741 = vadd.xlane.f32.xlu0 %v1740
        %v1742 = vpop.xlane.xlu0 %1741
        %v1743 = vsel %vm1521, %v1735, 0.0
        %1744 = vadd.xlane.f32.xlu0 %v1743
        %v1745 = vpop.xlane.xlu0 %1744
        %v1746 = vsel %vm1521, %v1737, 0.0
        %1747 = vadd.xlane.f32.xlu0 %v1746
        %v1748 = vpop.xlane.xlu0 %1747
        %v1749 = vsel %vm1521, %v1739, 0.0
        %1750 = vadd.xlane.f32.xlu0 %v1749
        %v1751 = vpop.xlane.xlu0 %1750
        %v1752 = vrcp.pop %v1742
        %v1753 = vrcp.pop %v1745
        %v1754 = vrcp.pop %v1748
        %v1755 = vrcp.pop %v1751
        %v1756 = vmul.f32 %v1733, %v1752
        %v1757 = vmul.f32 %v1735, %v1753
        %v1758 = vmul.f32 %v1737, %v1754
        %v1759 = vmul.f32 %v1739, %v1755
        %v1760 = vpack.c.bf16 %v1756, %v1756
        %v1761 = vpack.c.bf16 %v1757, %v1757
        %v1762 = vpack.c.bf16 %v1758, %v1758
        %v1763 = vpack.c.bf16 %v1759, %v1759
        %v1764 = vpack.c.bf16 %v1184, %v1184
        %v1765 = vpack.c.bf16 %v1236, %v1236
        %v1766 = vpack.c.bf16 %v1288, %v1288
        %v1767 = vpack.c.bf16 %v1340, %v1340
        %v1769 = vsel %vm1521, %v1760, 0
        %vm1771 = vcmask 1043456
        %v1773 = vsel %vm1771, %v1764, 0
        %1775 = vmatprep.subr.bf16.mxu0 0
        %1776 = vmatpush1.bf16.msra.mxu0 %v1773
        %1777 = vmatprep.subr.bf16.mxu0 0
        %1778 = vmatpush1.bf16.msra.mxu0 0
        %1779 = vmatprep.subr.bf16.mxu0 0
        %1780 = vmatpush1.bf16.msra.mxu0 0
        %1781 = vmatprep.subr.bf16.mxu0 0
        %1782 = vmatpush1.bf16.msra.mxu0 0
        %1783 = vmatprep.subr.bf16.mxu0 0
        %1784 = vmatpush1.bf16.msra.mxu0 0
        %1785 = vmatprep.subr.bf16.mxu0 0
        %1786 = vmatpush1.bf16.msra.mxu0 0
        %1787 = vmatprep.subr.bf16.mxu0 0
        %1788 = vmatpush1.bf16.msra.mxu0 0
        %1789 = vmatprep.subr.bf16.mxu0 0
        %1790 = vmatpush1.bf16.msra.mxu0 0
        %1791 = vmatprep.subr.bf16.mxu0 0
        %1792 = vmatpush1.bf16.msra.mxu0 0
        %1793 = vmatprep.subr.bf16.mxu0 0
        %1794 = vmatpush1.bf16.msra.mxu0 0
        %1795 = vmatprep.subr.bf16.mxu0 0
        %1796 = vmatpush1.bf16.msra.mxu0 0
        %1797 = vmatprep.subr.bf16.mxu0 0
        %1798 = vmatpush1.bf16.msra.mxu0 0
        %1799 = vmatprep.subr.bf16.mxu0 0
        %1800 = vmatpush1.bf16.msra.mxu0 0
        %1801 = vmatprep.subr.bf16.mxu0 0
        %1802 = vmatpush1.bf16.msra.mxu0 0
        %1803 = vmatprep.subr.bf16.mxu0 0
        %1804 = vmatpush1.bf16.msra.mxu0 0
        %1805 = vmatprep.subr.bf16.mxu0 0
        %1806 = vmatpush1.bf16.msra.mxu0 0
        %1807 = vmatprep.mubr.bf16.mxu0 0
        %1808 = vmatmul.mubr.bf16.gmra.mrb[0].mxu0 %v1769
        %v1809 = vpop.f32.mrb[0].mxu0
        %v1810 = vadd.f32 0.0, %v1809
        %v1811 = vpop.f32.mrb[0].mxu0
        %v1812 = vpop.f32.mrb[0].mxu0
        %v1813 = vpop.f32.mrb[0].mxu0
        %1814 = vdwg.mxu0
        %v1816 = vsel %vm1521, %v1761, 0
        %v1819 = vsel %vm1771, %v1765, 0
        %1821 = vmatprep.subr.bf16.mxu0 0
        %1822 = vmatpush1.bf16.msra.mxu0 %v1819
        %1823 = vmatprep.subr.bf16.mxu0 0
        %1824 = vmatpush1.bf16.msra.mxu0 0
        %1825 = vmatprep.subr.bf16.mxu0 0
        %1826 = vmatpush1.bf16.msra.mxu0 0
        %1827 = vmatprep.subr.bf16.mxu0 0
        %1828 = vmatpush1.bf16.msra.mxu0 0
        %1829 = vmatprep.subr.bf16.mxu0 0
        %1830 = vmatpush1.bf16.msra.mxu0 0
        %1831 = vmatprep.subr.bf16.mxu0 0
        %1832 = vmatpush1.bf16.msra.mxu0 0
        %1833 = vmatprep.subr.bf16.mxu0 0
        %1834 = vmatpush1.bf16.msra.mxu0 0
        %1835 = vmatprep.subr.bf16.mxu0 0
        %1836 = vmatpush1.bf16.msra.mxu0 0
        %1837 = vmatprep.subr.bf16.mxu0 0
        %1838 = vmatpush1.bf16.msra.mxu0 0
        %1839 = vmatprep.subr.bf16.mxu0 0
        %1840 = vmatpush1.bf16.msra.mxu0 0
        %1841 = vmatprep.subr.bf16.mxu0 0
        %1842 = vmatpush1.bf16.msra.mxu0 0
        %1843 = vmatprep.subr.bf16.mxu0 0
        %1844 = vmatpush1.bf16.msra.mxu0 0
        %1845 = vmatprep.subr.bf16.mxu0 0
        %1846 = vmatpush1.bf16.msra.mxu0 0
        %1847 = vmatprep.subr.bf16.mxu0 0
        %1848 = vmatpush1.bf16.msra.mxu0 0
        %1849 = vmatprep.subr.bf16.mxu0 0
        %1850 = vmatpush1.bf16.msra.mxu0 0
        %1851 = vmatprep.subr.bf16.mxu0 0
        %1852 = vmatpush1.bf16.msra.mxu0 0
        %1853 = vmatprep.mubr.bf16.mxu0 0
        %1854 = vmatmul.mubr.bf16.gmra.mrb[0].mxu0 %v1816
        %v1855 = vpop.f32.mrb[0].mxu0
        %v1856 = vadd.f32 0.0, %v1855
        %v1857 = vpop.f32.mrb[0].mxu0
        %v1858 = vpop.f32.mrb[0].mxu0
        %v1859 = vpop.f32.mrb[0].mxu0
        %1860 = vdwg.mxu0
        %v1862 = vsel %vm1521, %v1762, 0
        %v1865 = vsel %vm1771, %v1766, 0
        %1867 = vmatprep.subr.bf16.mxu0 0
        %1868 = vmatpush1.bf16.msra.mxu0 %v1865
        %1869 = vmatprep.subr.bf16.mxu0 0
        %1870 = vmatpush1.bf16.msra.mxu0 0
        %1871 = vmatprep.subr.bf16.mxu0 0
        %1872 = vmatpush1.bf16.msra.mxu0 0
        %1873 = vmatprep.subr.bf16.mxu0 0
        %1874 = vmatpush1.bf16.msra.mxu0 0
        %1875 = vmatprep.subr.bf16.mxu0 0
        %1876 = vmatpush1.bf16.msra.mxu0 0
        %1877 = vmatprep.subr.bf16.mxu0 0
        %1878 = vmatpush1.bf16.msra.mxu0 0
        %1879 = vmatprep.subr.bf16.mxu0 0
        %1880 = vmatpush1.bf16.msra.mxu0 0
        %1881 = vmatprep.subr.bf16.mxu0 0
        %1882 = vmatpush1.bf16.msra.mxu0 0
        %1883 = vmatprep.subr.bf16.mxu0 0
        %1884 = vmatpush1.bf16.msra.mxu0 0
        %1885 = vmatprep.subr.bf16.mxu0 0
        %1886 = vmatpush1.bf16.msra.mxu0 0
        %1887 = vmatprep.subr.bf16.mxu0 0
        %1888 = vmatpush1.bf16.msra.mxu0 0
        %1889 = vmatprep.subr.bf16.mxu0 0
        %1890 = vmatpush1.bf16.msra.mxu0 0
        %1891 = vmatprep.subr.bf16.mxu0 0
        %1892 = vmatpush1.bf16.msra.mxu0 0
        %1893 = vmatprep.subr.bf16.mxu0 0
        %1894 = vmatpush1.bf16.msra.mxu0 0
        %1895 = vmatprep.subr.bf16.mxu0 0
        %1896 = vmatpush1.bf16.msra.mxu0 0
        %1897 = vmatprep.subr.bf16.mxu0 0
        %1898 = vmatpush1.bf16.msra.mxu0 0
        %1899 = vmatprep.mubr.bf16.mxu0 0
        %1900 = vmatmul.mubr.bf16.gmra.mrb[0].mxu0 %v1862
        %v1901 = vpop.f32.mrb[0].mxu0
        %v1902 = vadd.f32 0.0, %v1901
        %v1903 = vpop.f32.mrb[0].mxu0
        %v1904 = vpop.f32.mrb[0].mxu0
        %v1905 = vpop.f32.mrb[0].mxu0
        %1906 = vdwg.mxu0
        %v1908 = vsel %vm1521, %v1763, 0
        %v1911 = vsel %vm1771, %v1767, 0
        %1913 = vmatprep.subr.bf16.mxu0 0
        %1914 = vmatpush1.bf16.msra.mxu0 %v1911
        %1915 = vmatprep.subr.bf16.mxu0 0
        %1916 = vmatpush1.bf16.msra.mxu0 0
        %1917 = vmatprep.subr.bf16.mxu0 0
        %1918 = vmatpush1.bf16.msra.mxu0 0
        %1919 = vmatprep.subr.bf16.mxu0 0
        %1920 = vmatpush1.bf16.msra.mxu0 0
        %1921 = vmatprep.subr.bf16.mxu0 0
        %1922 = vmatpush1.bf16.msra.mxu0 0
        %1923 = vmatprep.subr.bf16.mxu0 0
        %1924 = vmatpush1.bf16.msra.mxu0 0
        %1925 = vmatprep.subr.bf16.mxu0 0
        %1926 = vmatpush1.bf16.msra.mxu0 0
        %1927 = vmatprep.subr.bf16.mxu0 0
        %1928 = vmatpush1.bf16.msra.mxu0 0
        %1929 = vmatprep.subr.bf16.mxu0 0
        %1930 = vmatpush1.bf16.msra.mxu0 0
        %1931 = vmatprep.subr.bf16.mxu0 0
        %1932 = vmatpush1.bf16.msra.mxu0 0
        %1933 = vmatprep.subr.bf16.mxu0 0
        %1934 = vmatpush1.bf16.msra.mxu0 0
        %1935 = vmatprep.subr.bf16.mxu0 0
        %1936 = vmatpush1.bf16.msra.mxu0 0
        %1937 = vmatprep.subr.bf16.mxu0 0
        %1938 = vmatpush1.bf16.msra.mxu0 0
        %1939 = vmatprep.subr.bf16.mxu0 0
        %1940 = vmatpush1.bf16.msra.mxu0 0
        %1941 = vmatprep.subr.bf16.mxu0 0
        %1942 = vmatpush1.bf16.msra.mxu0 0
        %1943 = vmatprep.subr.bf16.mxu0 0
        %1944 = vmatpush1.bf16.msra.mxu0 0
        %1945 = vmatprep.mubr.bf16.mxu0 0
        %1946 = vmatmul.mubr.bf16.gmra.mrb[0].mxu0 %v1908
        %v1947 = vpop.f32.mrb[0].mxu0
        %v1948 = vadd.f32 0.0, %v1947
        %v1949 = vpop.f32.mrb[0].mxu0
        %v1950 = vpop.f32.mrb[0].mxu0
        %v1951 = vpop.f32.mrb[0].mxu0
        %1952 = vdwg.mxu0
        %v1953 = vpack.c.bf16 %v1810, %v1810
        %v1954 = vpack.c.bf16 %v1856, %v1856
        %v1955 = vpack.c.bf16 %v1902, %v1902
        %v1956 = vpack.c.bf16 %v1948, %v1948
        %v1957 = vld [vmem:[%s623] sm:$0xf]
        %v1958 = vld [vmem:[%s623 + $0x4] sm:$0xf]
        %v1959 = vld [vmem:[%s623 + $0x8] sm:$0xf]
        %v1960 = vld [vmem:[%s623 + $0xc] sm:$0xf]
        %v1962 = vsel %vm1521, %v1953, 0
        %v1965 = vsel %vm1771, %v1957, 0
        %1967 = vmatprep.subr.bf16.mxu0 0
        %1968 = vmatpush1.bf16.msra.mxu0 %v1965
        %1969 = vmatprep.subr.bf16.mxu0 0
        %1970 = vmatpush1.bf16.msra.mxu0 0
        %1971 = vmatprep.subr.bf16.mxu0 0
        %1972 = vmatpush1.bf16.msra.mxu0 0
        %1973 = vmatprep.subr.bf16.mxu0 0
        %1974 = vmatpush1.bf16.msra.mxu0 0
        %1975 = vmatprep.subr.bf16.mxu0 0
        %1976 = vmatpush1.bf16.msra.mxu0 0
        %1977 = vmatprep.subr.bf16.mxu0 0
        %1978 = vmatpush1.bf16.msra.mxu0 0
        %1979 = vmatprep.subr.bf16.mxu0 0
        %1980 = vmatpush1.bf16.msra.mxu0 0
        %1981 = vmatprep.subr.bf16.mxu0 0
        %1982 = vmatpush1.bf16.msra.mxu0 0
        %1983 = vmatprep.subr.bf16.mxu0 0
        %1984 = vmatpush1.bf16.msra.mxu0 0
        %1985 = vmatprep.subr.bf16.mxu0 0
        %1986 = vmatpush1.bf16.msra.mxu0 0
        %1987 = vmatprep.subr.bf16.mxu0 0
        %1988 = vmatpush1.bf16.msra.mxu0 0
        %1989 = vmatprep.subr.bf16.mxu0 0
        %1990 = vmatpush1.bf16.msra.mxu0 0
        %1991 = vmatprep.subr.bf16.mxu0 0
        %1992 = vmatpush1.bf16.msra.mxu0 0
        %1993 = vmatprep.subr.bf16.mxu0 0
        %1994 = vmatpush1.bf16.msra.mxu0 0
        %1995 = vmatprep.subr.bf16.mxu0 0
        %1996 = vmatpush1.bf16.msra.mxu0 0
        %1997 = vmatprep.subr.bf16.mxu0 0
        %1998 = vmatpush1.bf16.msra.mxu0 0
        %1999 = vmatprep.mubr.bf16.mxu0 0
        %2000 = vmatmul.mubr.bf16.gmra.mrb[0].mxu0 %v1962
        %v2001 = vpop.f32.mrb[0].mxu0
        %v2002 = vadd.f32 0.0, %v2001
        %v2003 = vpop.f32.mrb[0].mxu0
        %v2004 = vpop.f32.mrb[0].mxu0
        %v2005 = vpop.f32.mrb[0].mxu0
        %2006 = vdwg.mxu0
        %v2008 = vsel %vm1521, %v1954, 0
        %v2011 = vsel %vm1771, %v1958, 0
        %2013 = vmatprep.subr.bf16.mxu0 0
        %2014 = vmatpush1.bf16.msra.mxu0 %v2011
        %2015 = vmatprep.subr.bf16.mxu0 0
        %2016 = vmatpush1.bf16.msra.mxu0 0
        %2017 = vmatprep.subr.bf16.mxu0 0
        %2018 = vmatpush1.bf16.msra.mxu0 0
        %2019 = vmatprep.subr.bf16.mxu0 0
        %2020 = vmatpush1.bf16.msra.mxu0 0
        %2021 = vmatprep.subr.bf16.mxu0 0
        %2022 = vmatpush1.bf16.msra.mxu0 0
        %2023 = vmatprep.subr.bf16.mxu0 0
        %2024 = vmatpush1.bf16.msra.mxu0 0
        %2025 = vmatprep.subr.bf16.mxu0 0
        %2026 = vmatpush1.bf16.msra.mxu0 0
        %2027 = vmatprep.subr.bf16.mxu0 0
        %2028 = vmatpush1.bf16.msra.mxu0 0
        %2029 = vmatprep.subr.bf16.mxu0 0
        %2030 = vmatpush1.bf16.msra.mxu0 0
        %2031 = vmatprep.subr.bf16.mxu0 0
        %2032 = vmatpush1.bf16.msra.mxu0 0
        %2033 = vmatprep.subr.bf16.mxu0 0
        %2034 = vmatpush1.bf16.msra.mxu0 0
        %2035 = vmatprep.subr.bf16.mxu0 0
        %2036 = vmatpush1.bf16.msra.mxu0 0
        %2037 = vmatprep.subr.bf16.mxu0 0
        %2038 = vmatpush1.bf16.msra.mxu0 0
        %2039 = vmatprep.subr.bf16.mxu0 0
        %2040 = vmatpush1.bf16.msra.mxu0 0
        %2041 = vmatprep.subr.bf16.mxu0 0
        %2042 = vmatpush1.bf16.msra.mxu0 0
        %2043 = vmatprep.subr.bf16.mxu0 0
        %2044 = vmatpush1.bf16.msra.mxu0 0
        %2045 = vmatprep.mubr.bf16.mxu0 0
        %2046 = vmatmul.mubr.bf16.gmra.mrb[0].mxu0 %v2008
        %v2047 = vpop.f32.mrb[0].mxu0
        %v2048 = vadd.f32 0.0, %v2047
        %v2049 = vpop.f32.mrb[0].mxu0
        %v2050 = vpop.f32.mrb[0].mxu0
        %v2051 = vpop.f32.mrb[0].mxu0
        %2052 = vdwg.mxu0
        %v2054 = vsel %vm1521, %v1955, 0
        %v2057 = vsel %vm1771, %v1959, 0
        %2059 = vmatprep.subr.bf16.mxu0 0
        %2060 = vmatpush1.bf16.msra.mxu0 %v2057
        %2061 = vmatprep.subr.bf16.mxu0 0
        %2062 = vmatpush1.bf16.msra.mxu0 0
        %2063 = vmatprep.subr.bf16.mxu0 0
        %2064 = vmatpush1.bf16.msra.mxu0 0
        %2065 = vmatprep.subr.bf16.mxu0 0
        %2066 = vmatpush1.bf16.msra.mxu0 0
        %2067 = vmatprep.subr.bf16.mxu0 0
        %2068 = vmatpush1.bf16.msra.mxu0 0
        %2069 = vmatprep.subr.bf16.mxu0 0
        %2070 = vmatpush1.bf16.msra.mxu0 0
        %2071 = vmatprep.subr.bf16.mxu0 0
        %2072 = vmatpush1.bf16.msra.mxu0 0
        %2073 = vmatprep.subr.bf16.mxu0 0
        %2074 = vmatpush1.bf16.msra.mxu0 0
        %2075 = vmatprep.subr.bf16.mxu0 0
        %2076 = vmatpush1.bf16.msra.mxu0 0
        %2077 = vmatprep.subr.bf16.mxu0 0
        %2078 = vmatpush1.bf16.msra.mxu0 0
        %2079 = vmatprep.subr.bf16.mxu0 0
        %2080 = vmatpush1.bf16.msra.mxu0 0
        %2081 = vmatprep.subr.bf16.mxu0 0
        %2082 = vmatpush1.bf16.msra.mxu0 0
        %2083 = vmatprep.subr.bf16.mxu0 0
        %2084 = vmatpush1.bf16.msra.mxu0 0
        %2085 = vmatprep.subr.bf16.mxu0 0
        %2086 = vmatpush1.bf16.msra.mxu0 0
        %2087 = vmatprep.subr.bf16.mxu0 0
        %2088 = vmatpush1.bf16.msra.mxu0 0
        %2089 = vmatprep.subr.bf16.mxu0 0
        %2090 = vmatpush1.bf16.msra.mxu0 0
        %2091 = vmatprep.mubr.bf16.mxu0 0
        %2092 = vmatmul.mubr.bf16.gmra.mrb[0].mxu0 %v2054
        %v2093 = vpop.f32.mrb[0].mxu0
        %v2094 = vadd.f32 0.0, %v2093
        %v2095 = vpop.f32.mrb[0].mxu0
        %v2096 = vpop.f32.mrb[0].mxu0
        %v2097 = vpop.f32.mrb[0].mxu0
        %2098 = vdwg.mxu0
        %v2100 = vsel %vm1521, %v1956, 0
        %v2103 = vsel %vm1771, %v1960, 0
        %2105 = vmatprep.subr.bf16.mxu0 0
        %2106 = vmatpush1.bf16.msra.mxu0 %v2103
        %2107 = vmatprep.subr.bf16.mxu0 0
        %2108 = vmatpush1.bf16.msra.mxu0 0
        %2109 = vmatprep.subr.bf16.mxu0 0
        %2110 = vmatpush1.bf16.msra.mxu0 0
        %2111 = vmatprep.subr.bf16.mxu0 0
        %2112 = vmatpush1.bf16.msra.mxu0 0
        %2113 = vmatprep.subr.bf16.mxu0 0
        %2114 = vmatpush1.bf16.msra.mxu0 0
        %2115 = vmatprep.subr.bf16.mxu0 0
        %2116 = vmatpush1.bf16.msra.mxu0 0
        %2117 = vmatprep.subr.bf16.mxu0 0
        %2118 = vmatpush1.bf16.msra.mxu0 0
        %2119 = vmatprep.subr.bf16.mxu0 0
        %2120 = vmatpush1.bf16.msra.mxu0 0
        %2121 = vmatprep.subr.bf16.mxu0 0
        %2122 = vmatpush1.bf16.msra.mxu0 0
        %2123 = vmatprep.subr.bf16.mxu0 0
        %2124 = vmatpush1.bf16.msra.mxu0 0
        %2125 = vmatprep.subr.bf16.mxu0 0
        %2126 = vmatpush1.bf16.msra.mxu0 0
        %2127 = vmatprep.subr.bf16.mxu0 0
        %2128 = vmatpush1.bf16.msra.mxu0 0
        %2129 = vmatprep.subr.bf16.mxu0 0
        %2130 = vmatpush1.bf16.msra.mxu0 0
        %2131 = vmatprep.subr.bf16.mxu0 0
        %2132 = vmatpush1.bf16.msra.mxu0 0
        %2133 = vmatprep.subr.bf16.mxu0 0
        %2134 = vmatpush1.bf16.msra.mxu0 0
        %2135 = vmatprep.subr.bf16.mxu0 0
        %2136 = vmatpush1.bf16.msra.mxu0 0
        %2137 = vmatprep.mubr.bf16.mxu0 0
        %2138 = vmatmul.mubr.bf16.gmra.mrb[0].mxu0 %v2100
        %v2139 = vpop.f32.mrb[0].mxu0
        %v2140 = vadd.f32 0.0, %v2139
        %v2141 = vpop.f32.mrb[0].mxu0
        %v2142 = vpop.f32.mrb[0].mxu0
        %v2143 = vpop.f32.mrb[0].mxu0
        %2144 = vdwg.mxu0
        %v2145 = vsel %vm653, %v2002, 0.0
        %v2146 = vsel %vm653, %v2048, 0.0
        %v2147 = vadd.f32 %v2145, %v2146
        %v2148 = vsel %vm653, %v2094, 0.0
        %v2149 = vadd.f32 %v2147, %v2148
        %v2150 = vsel %vm653, %v2140, 0.0
        %v2151 = vadd.f32 %v2149, %v2150
        %v2152 = vadd.f32 %v650, %v2151
        %v2153 = vld [vmem:[%s626] sm:$0x1]
        %v2154 = vmul.f32 %v2152, %v2152
        %v2155 = vsel %vm653, %v2154, 0.0
        %2156 = vadd.xlane.f32.xlu0 %v2155
        %v2157 = vpop.xlane.xlu0 %2156
        %v2158 = vmul.f32 %v2157, %v657
        %v2159 = vadd.f32 %v2158, 1e-05
        %v2160 = vrsqrt.pop %v2159
        %v2161 = vmul.f32 %v2152, %v2160
        %v2163 = vlaneseq
        %v2164 = vshrl.u32 %v2163, 7
        %v2165 = vsub.s32 0, %v2164
        %v2166 = vrot.slane %v2153, %v2165
        %v2168 = vmul.f32 %v2161, %v2166
        %v2169 = vpack.c.bf16 %v2168, %v2168
        %v2170 = vld [vmem:[%s631] sm:$0xff]
        %v2171 = vld [vmem:[%s631 + $0x8] sm:$0xff]
        %v2172 = vld [vmem:[%s631 + $0x10] sm:$0xff]
        %v2173 = vld [vmem:[%s631 + $0x18] sm:$0xff]
        %v2178 = vunpack.c.l.b16 %v2170
        %v2179 = vunpack.c.h.b16 %v2170
        %v2180 = vunpack.c.l.b16 %v2171
        %v2181 = vunpack.c.h.b16 %v2171
        %v2182 = vunpack.c.l.b16 %v2172
        %v2183 = vunpack.c.h.b16 %v2172
        %v2184 = vunpack.c.l.b16 %v2173
        %v2185 = vunpack.c.h.b16 %v2173
        %v2186 = vpack.c.b16 %v2180, %v2178
        %v2187 = vpack.c.b16 %v2181, %v2179
        %v2188 = vpack.c.b16 %v2184, %v2182
        %v2189 = vpack.c.b16 %v2185, %v2183
        %v2195 = vsel %vm653, %v2169, 0
        %2197 = vmatprep.subr.bf16.mxu0 %v2187
        %2198 = vmatpush1.bf16.msra.mxu0 %v2186
        %2199 = vmatprep.subr.bf16.mxu0 %v2189
        %2200 = vmatpush1.bf16.msra.mxu0 %v2188
        %2201 = vmatprep.subr.bf16.mxu0 0
        %2202 = vmatpush1.bf16.msra.mxu0 0
        %2203 = vmatprep.subr.bf16.mxu0 0
        %2204 = vmatpush1.bf16.msra.mxu0 0
        %2205 = vmatprep.subr.bf16.mxu0 0
        %2206 = vmatpush1.bf16.msra.mxu0 0
        %2207 = vmatprep.subr.bf16.mxu0 0
        %2208 = vmatpush1.bf16.msra.mxu0 0
        %2209 = vmatprep.subr.bf16.mxu0 0
        %2210 = vmatpush1.bf16.msra.mxu0 0
        %2211 = vmatprep.subr.bf16.mxu0 0
        %2212 = vmatpush1.bf16.msra.mxu0 0
        %2213 = vmatprep.subr.bf16.mxu0 0
        %2214 = vmatpush1.bf16.msra.mxu0 0
        %2215 = vmatprep.subr.bf16.mxu0 0
        %2216 = vmatpush1.bf16.msra.mxu0 0
        %2217 = vmatprep.subr.bf16.mxu0 0
        %2218 = vmatpush1.bf16.msra.mxu0 0
        %2219 = vmatprep.subr.bf16.mxu0 0
        %2220 = vmatpush1.bf16.msra.mxu0 0
        %2221 = vmatprep.subr.bf16.mxu0 0
        %2222 = vmatpush1.bf16.msra.mxu0 0
        %2223 = vmatprep.subr.bf16.mxu0 0
        %2224 = vmatpush1.bf16.msra.mxu0 0
        %2225 = vmatprep.subr.bf16.mxu0 0
        %2226 = vmatpush1.bf16.msra.mxu0 0
        %2227 = vmatprep.subr.bf16.mxu0 0
        %2228 = vmatpush1.bf16.msra.mxu0 0
        %2229 = vmatprep.mubr.bf16.mxu0 0
        %2230 = vmatmul.mubr.bf16.gmra.mrb[0].mxu0 %v2195
        %v2231 = vpop.f32.mrb[0].mxu0
        %v2232 = vadd.f32 0.0, %v2231
        %v2233 = vpop.f32.mrb[0].mxu0
        %v2234 = vadd.f32 0.0, %v2233
        %v2235 = vpop.f32.mrb[0].mxu0
        %v2236 = vpop.f32.mrb[0].mxu0
        %2237 = vdwg.mxu0
        %v2238 = vld [vmem:[%s636] sm:$0xff]
        %v2239 = vld [vmem:[%s636 + $0x8] sm:$0xff]
        %v2240 = vld [vmem:[%s636 + $0x10] sm:$0xff]
        %v2241 = vld [vmem:[%s636 + $0x18] sm:$0xff]
        %v2246 = vunpack.c.l.b16 %v2238
        %v2247 = vunpack.c.h.b16 %v2238
        %v2248 = vunpack.c.l.b16 %v2239
        %v2249 = vunpack.c.h.b16 %v2239
        %v2250 = vunpack.c.l.b16 %v2240
        %v2251 = vunpack.c.h.b16 %v2240
        %v2252 = vunpack.c.l.b16 %v2241
        %v2253 = vunpack.c.h.b16 %v2241
        %v2254 = vpack.c.b16 %v2248, %v2246
        %v2255 = vpack.c.b16 %v2249, %v2247
        %v2256 = vpack.c.b16 %v2252, %v2250
        %v2257 = vpack.c.b16 %v2253, %v2251
        %2262 = vmatprep.subr.bf16.mxu0 %v2255
        %2263 = vmatpush1.bf16.msra.mxu0 %v2254
        %2264 = vmatprep.subr.bf16.mxu0 %v2257
        %2265 = vmatpush1.bf16.msra.mxu0 %v2256
        %2266 = vmatprep.subr.bf16.mxu0 0
        %2267 = vmatpush1.bf16.msra.mxu0 0
        %2268 = vmatprep.subr.bf16.mxu0 0
        %2269 = vmatpush1.bf16.msra.mxu0 0
        %2270 = vmatprep.subr.bf16.mxu0 0
        %2271 = vmatpush1.bf16.msra.mxu0 0
        %2272 = vmatprep.subr.bf16.mxu0 0
        %2273 = vmatpush1.bf16.msra.mxu0 0
        %2274 = vmatprep.subr.bf16.mxu0 0
        %2275 = vmatpush1.bf16.msra.mxu0 0
        %2276 = vmatprep.subr.bf16.mxu0 0
        %2277 = vmatpush1.bf16.msra.mxu0 0
        %2278 = vmatprep.subr.bf16.mxu0 0
        %2279 = vmatpush1.bf16.msra.mxu0 0
        %2280 = vmatprep.subr.bf16.mxu0 0
        %2281 = vmatpush1.bf16.msra.mxu0 0
        %2282 = vmatprep.subr.bf16.mxu0 0
        %2283 = vmatpush1.bf16.msra.mxu0 0
        %2284 = vmatprep.subr.bf16.mxu0 0
        %2285 = vmatpush1.bf16.msra.mxu0 0
        %2286 = vmatprep.subr.bf16.mxu0 0
        %2287 = vmatpush1.bf16.msra.mxu0 0
        %2288 = vmatprep.subr.bf16.mxu0 0
        %2289 = vmatpush1.bf16.msra.mxu0 0
        %2290 = vmatprep.subr.bf16.mxu0 0
        %2291 = vmatpush1.bf16.msra.mxu0 0
        %2292 = vmatprep.subr.bf16.mxu0 0
        %2293 = vmatpush1.bf16.msra.mxu0 0
        %2294 = vmatprep.mubr.bf16.mxu0 0
        %2295 = vmatmul.mubr.bf16.gmra.mrb[0].mxu0 %v2195
        %v2296 = vpop.f32.mrb[0].mxu0
        %v2297 = vadd.f32 0.0, %v2296
        %v2298 = vpop.f32.mrb[0].mxu0
        %v2299 = vadd.f32 0.0, %v2298
        %v2300 = vpop.f32.mrb[0].mxu0
        %v2301 = vpop.f32.mrb[0].mxu0
        %2302 = vdwg.mxu0
        %v2303 = vxor.u32 %v2232, 2147483648
        %v2304 = vxor.u32 %v2234, 2147483648
        %v2305 = vmul.f32 %v2303, 1.442695
        %v2306 = vpow.pop %v2305
        %v2307 = vmul.f32 %v2304, 1.442695
        %v2308 = vpow.pop %v2307
        %v2309 = vadd.f32 %v2306, 1.0
        %v2310 = vadd.f32 %v2308, 1.0
        %v2311 = vrcp.pop %v2309
        %v2312 = vmul.f32 1.0, %v2311
        %v2313 = vrcp.pop %v2310
        %v2314 = vmul.f32 1.0, %v2313
        %v2315 = vmul.f32 %v2232, %v2312
        %v2316 = vmul.f32 %v2234, %v2314
        %v2317 = vmul.f32 %v2315, %v2297
        %v2318 = vmul.f32 %v2316, %v2299
        %v2319 = vpack.c.bf16 %v2317, %v2317
        %v2320 = vpack.c.bf16 %v2318, %v2318
        %v2321 = vld [vmem:[%s641] sm:$0xf]
        %v2322 = vld [vmem:[%s641 + $0x4] sm:$0xf]
        %v2323 = vld [vmem:[%s641 + $0x8] sm:$0xf]
        %v2324 = vld [vmem:[%s641 + $0xc] sm:$0xf]
        %v2325 = vld [vmem:[%s641 + $0x10] sm:$0xf]
        %v2326 = vld [vmem:[%s641 + $0x14] sm:$0xf]
        %v2327 = vld [vmem:[%s641 + $0x18] sm:$0xf]
        %v2328 = vld [vmem:[%s641 + $0x1c] sm:$0xf]
        %v2329 = vld [vmem:[%s641 + $0x20] sm:$0xf]
        %v2330 = vld [vmem:[%s641 + $0x24] sm:$0xf]
        %v2331 = vld [vmem:[%s641 + $0x28] sm:$0xf]
        %v2332 = vld [vmem:[%s641 + $0x2c] sm:$0xf]
        %v2333 = vld [vmem:[%s641 + $0x30] sm:$0xf]
        %v2334 = vld [vmem:[%s641 + $0x34] sm:$0xf]
        %v2335 = vld [vmem:[%s641 + $0x38] sm:$0xf]
        %v2336 = vld [vmem:[%s641 + $0x3c] sm:$0xf]
        %v2337 = vld [vmem:[%s641 + $0x40] sm:$0xf]
        %v2338 = vld [vmem:[%s641 + $0x44] sm:$0xf]
        %v2339 = vld [vmem:[%s641 + $0x48] sm:$0xf]
        %v2340 = vld [vmem:[%s641 + $0x4c] sm:$0xf]
        %v2341 = vld [vmem:[%s641 + $0x50] sm:$0xf]
        %v2342 = vld [vmem:[%s641 + $0x54] sm:$0xf]
        %v2343 = vld [vmem:[%s641 + $0x58] sm:$0xf]
        %v2344 = vld [vmem:[%s641 + $0x5c] sm:$0xf]
        %v2345 = vld [vmem:[%s641 + $0x60] sm:$0xf]
        %v2346 = vld [vmem:[%s641 + $0x64] sm:$0xf]
        %v2347 = vld [vmem:[%s641 + $0x68] sm:$0xf]
        %v2348 = vld [vmem:[%s641 + $0x6c] sm:$0xf]
        %v2349 = vld [vmem:[%s641 + $0x70] sm:$0xf]
        %v2350 = vld [vmem:[%s641 + $0x74] sm:$0xf]
        %v2351 = vld [vmem:[%s641 + $0x78] sm:$0xf]
        %v2352 = vld [vmem:[%s641 + $0x7c] sm:$0xf]
        %v2385 = vunpack.c.l.b16 %v2321
        %v2386 = vunpack.c.l.b16 %v2322
        %v2387 = vunpack.c.l.b16 %v2323
        %v2388 = vunpack.c.l.b16 %v2324
        %v2389 = vunpack.c.l.b16 %v2325
        %v2390 = vunpack.c.l.b16 %v2326
        %v2391 = vunpack.c.l.b16 %v2327
        %v2392 = vunpack.c.l.b16 %v2328
        %v2393 = vunpack.c.l.b16 %v2329
        %v2394 = vunpack.c.l.b16 %v2330
        %v2395 = vunpack.c.l.b16 %v2331
        %v2396 = vunpack.c.l.b16 %v2332
        %v2397 = vunpack.c.l.b16 %v2333
        %v2398 = vunpack.c.l.b16 %v2334
        %v2399 = vunpack.c.l.b16 %v2335
        %v2400 = vunpack.c.l.b16 %v2336
        %v2401 = vunpack.c.l.b16 %v2337
        %v2402 = vunpack.c.l.b16 %v2338
        %v2403 = vunpack.c.l.b16 %v2339
        %v2404 = vunpack.c.l.b16 %v2340
        %v2405 = vunpack.c.l.b16 %v2341
        %v2406 = vunpack.c.l.b16 %v2342
        %v2407 = vunpack.c.l.b16 %v2343
        %v2408 = vunpack.c.l.b16 %v2344
        %v2409 = vunpack.c.l.b16 %v2345
        %v2410 = vunpack.c.l.b16 %v2346
        %v2411 = vunpack.c.l.b16 %v2347
        %v2412 = vunpack.c.l.b16 %v2348
        %v2413 = vunpack.c.l.b16 %v2349
        %v2414 = vunpack.c.l.b16 %v2350
        %v2415 = vunpack.c.l.b16 %v2351
        %v2416 = vunpack.c.l.b16 %v2352
        %v2417 = vpack.c.b16 %v2386, %v2385
        %v2418 = vpack.c.b16 %v2388, %v2387
        %v2419 = vpack.c.b16 %v2390, %v2389
        %v2420 = vpack.c.b16 %v2392, %v2391
        %v2421 = vpack.c.b16 %v2394, %v2393
        %v2422 = vpack.c.b16 %v2396, %v2395
        %v2423 = vpack.c.b16 %v2398, %v2397
        %v2424 = vpack.c.b16 %v2400, %v2399
        %v2425 = vpack.c.b16 %v2402, %v2401
        %v2426 = vpack.c.b16 %v2404, %v2403
        %v2427 = vpack.c.b16 %v2406, %v2405
        %v2428 = vpack.c.b16 %v2408, %v2407
        %v2429 = vpack.c.b16 %v2410, %v2409
        %v2430 = vpack.c.b16 %v2412, %v2411
        %v2431 = vpack.c.b16 %v2414, %v2413
        %v2432 = vpack.c.b16 %v2416, %v2415
        %2449 = vmatprep.subr.bf16.mxu0 0
        %2450 = vmatpush1.bf16.msra.mxu0 %v2417
        %2451 = vmatprep.subr.bf16.mxu0 0
        %2452 = vmatpush1.bf16.msra.mxu0 %v2418
        %2453 = vmatprep.subr.bf16.mxu0 0
        %2454 = vmatpush1.bf16.msra.mxu0 %v2419
        %2455 = vmatprep.subr.bf16.mxu0 0
        %2456 = vmatpush1.bf16.msra.mxu0 %v2420
        %2457 = vmatprep.subr.bf16.mxu0 0
        %2458 = vmatpush1.bf16.msra.mxu0 %v2421
        %2459 = vmatprep.subr.bf16.mxu0 0
        %2460 = vmatpush1.bf16.msra.mxu0 %v2422
        %2461 = vmatprep.subr.bf16.mxu0 0
        %2462 = vmatpush1.bf16.msra.mxu0 %v2423
        %2463 = vmatprep.subr.bf16.mxu0 0
        %2464 = vmatpush1.bf16.msra.mxu0 %v2424
        %2465 = vmatprep.subr.bf16.mxu0 0
        %2466 = vmatpush1.bf16.msra.mxu0 %v2425
        %2467 = vmatprep.subr.bf16.mxu0 0
        %2468 = vmatpush1.bf16.msra.mxu0 %v2426
        %2469 = vmatprep.subr.bf16.mxu0 0
        %2470 = vmatpush1.bf16.msra.mxu0 %v2427
        %2471 = vmatprep.subr.bf16.mxu0 0
        %2472 = vmatpush1.bf16.msra.mxu0 %v2428
        %2473 = vmatprep.subr.bf16.mxu0 0
        %2474 = vmatpush1.bf16.msra.mxu0 %v2429
        %2475 = vmatprep.subr.bf16.mxu0 0
        %2476 = vmatpush1.bf16.msra.mxu0 %v2430
        %2477 = vmatprep.subr.bf16.mxu0 0
        %2478 = vmatpush1.bf16.msra.mxu0 %v2431
        %2479 = vmatprep.subr.bf16.mxu0 0
        %2480 = vmatpush1.bf16.msra.mxu0 %v2432
        %2481 = vmatprep.mubr.bf16.mxu0 %v2320
        %2482 = vmatmul.mubr.bf16.gmra.mrb[0].mxu0 %v2319
        %v2483 = vpop.f32.mrb[0].mxu0
        %v2484 = vadd.f32 0.0, %v2483
        %v2485 = vpop.f32.mrb[0].mxu0
        %v2486 = vpop.f32.mrb[0].mxu0
        %v2487 = vpop.f32.mrb[0].mxu0
        %2488 = vdwg.mxu0
        %v2489 = vadd.f32 %v2152, %v2484
        %2490 = vst.msk [vmem:[#allocation2] sm:$0xff] %vm653, %v2489
        %p2491 = scmp.eq.s32.totalorder %s33, 1
        // Predicated region
        $region81: #{tpu_custom_call.1} parent=75 // pred_check
          %p2492 = pneg %p2491
        $region82: #{tpu_custom_call.1} parent=75 // pred_check_branch
          %2494 = sbr.rel (%p2492) target = $region84
        $region83: #{tpu_custom_call.1} parent=75 // pred_region
          %v2495 = vld [vmem:[%s12] sm:$0x1]
          %v2496 = vmul.f32 %v2489, %v2489
          %vm2497 = vcmask 261127
          %v2498 = vsel %vm2497, %v2496, 0.0
          %2499 = vadd.xlane.f32.xlu0 %v2498
          %v2500 = vpop.xlane.xlu0 %2499
          %v2501 = vmul.f32 %v2500, %v657
          %v2502 = vadd.f32 %v2501, 1e-05
          %v2503 = vrsqrt.pop %v2502
          %v2504 = vmul.f32 %v2489, %v2503
          %v2506 = vlaneseq
          %v2507 = vshrl.u32 %v2506, 7
          %v2508 = vsub.s32 0, %v2507
          %v2509 = vrot.slane %v2495, %v2508
          %v2511 = vmul.f32 %v2504, %v2509
          %v2512 = vpack.c.bf16 %v2511, %v2511
          %v2513 = vld [vmem:[%s13] sm:$0xf]
          %v2514 = vld [vmem:[%s13 + $0x4] sm:$0xf]
          %v2515 = vld [vmem:[%s13 + $0x8] sm:$0xf]
          %v2516 = vld [vmem:[%s13 + $0xc] sm:$0xf]
          %v2518 = vshrl.u32 %v2512, 16
          %v2520 = vrot.slane %v2518, 3
          %v2525 = vunpack.c.l.b16 %v2513
          %v2526 = vunpack.c.l.b16 %v2514
          %v2527 = vunpack.c.l.b16 %v2515
          %v2528 = vunpack.c.l.b16 %v2516
          %v2529 = vpack.c.b16 %v2526, %v2525
          %v2530 = vpack.c.b16 %v2528, %v2527
          %v2534 = vsel %vm653, %v2520, 0
          %2536 = vmatprep.subr.bf16.mxu0 0
          %2537 = vmatpush1.bf16.msra.mxu0 %v2529
          %2538 = vmatprep.subr.bf16.mxu0 0
          %2539 = vmatpush1.bf16.msra.mxu0 %v2530
          %2540 = vmatprep.subr.bf16.mxu0 0
          %2541 = vmatpush1.bf16.msra.mxu0 0
          %2542 = vmatprep.subr.bf16.mxu0 0
          %2543 = vmatpush1.bf16.msra.mxu0 0
          %2544 = vmatprep.subr.bf16.mxu0 0
          %2545 = vmatpush1.bf16.msra.mxu0 0
          %2546 = vmatprep.subr.bf16.mxu0 0
          %2547 = vmatpush1.bf16.msra.mxu0 0
          %2548 = vmatprep.subr.bf16.mxu0 0
          %2549 = vmatpush1.bf16.msra.mxu0 0
          %2550 = vmatprep.subr.bf16.mxu0 0
          %2551 = vmatpush1.bf16.msra.mxu0 0
          %2552 = vmatprep.subr.bf16.mxu0 0
          %2553 = vmatpush1.bf16.msra.mxu0 0
          %2554 = vmatprep.subr.bf16.mxu0 0
          %2555 = vmatpush1.bf16.msra.mxu0 0
          %2556 = vmatprep.subr.bf16.mxu0 0
          %2557 = vmatpush1.bf16.msra.mxu0 0
          %2558 = vmatprep.subr.bf16.mxu0 0
          %2559 = vmatpush1.bf16.msra.mxu0 0
          %2560 = vmatprep.subr.bf16.mxu0 0
          %2561 = vmatpush1.bf16.msra.mxu0 0
          %2562 = vmatprep.subr.bf16.mxu0 0
          %2563 = vmatpush1.bf16.msra.mxu0 0
          %2564 = vmatprep.subr.bf16.mxu0 0
          %2565 = vmatpush1.bf16.msra.mxu0 0
          %2566 = vmatprep.subr.bf16.mxu0 0
          %2567 = vmatpush1.bf16.msra.mxu0 0
          %2568 = vmatprep.mubr.bf16.mxu0 0
          %2569 = vmatmul.mubr.bf16.gmra.mrb[0].mxu0 %v2534
          %v2570 = vpop.f32.mrb[0].mxu0
          %v2571 = vadd.f32 0.0, %v2570
          %v2572 = vpop.f32.mrb[0].mxu0
          %v2573 = vpop.f32.mrb[0].mxu0
          %v2574 = vpop.f32.mrb[0].mxu0
          %2575 = vdwg.mxu0
          %vm2576 = vcmask 516096
          %2577 = vst.msk [vmem:[%s596] sm:$0x1] %vm2576, %v2571
        $region84: #{tpu_custom_call.1} parent=75 // pred_fallthru
          _
        %s2578 = sand.u32 %s392, 1
        %s2579 = scalar_lea.sflag [#allocation4], %s2578
        %s2580 = sand.u32 %s392, 1
        %s2581 = scalar_lea.vmem [#allocation3], %s2580
        // Predicated region
        $region85: #{tpu_custom_call.1} parent=75 // pred_check
          %p2582 = pneg %p402
        $region86: #{tpu_custom_call.1} parent=75 // pred_check_branch
          %2584 = sbr.rel (%p2582) target = $region88
        $region87: #{tpu_custom_call.1} parent=75 // pred_region
          %s2586 = ssub.s32 16, 16
          %2587 = vsyncadd %s2579, %s2586
          %s2588 = smul.addr %s32, 16
          %s2589 = scalar_lea.hbm %s14, %s2588
          %s2591 = sshll.u32 %s2581, 4
          %s2592 = int_to_ptr.vmem [resolvable:$true] %s2591
          %2594 = dma.vmem_to_hbm [thread:$0]  %s2592, 16, %s2589, %s2579
        $region88: #{tpu_custom_call.1} parent=75 // pred_fallthru
          _
      $region76: #{tpu_custom_call.1} parent=5 // pred_fallthru
        _
      %p2595 = scmp.le.s32.totalorder 2, %s23
      // Predicated region
      $region89: #{tpu_custom_call.1} parent=5 // pred_check
        %p2596 = pneg %p2595
      $region90: #{tpu_custom_call.1} parent=5 // pred_check_branch
        %2598 = sbr.rel (%p2596) target = $region92
      $region91: #{tpu_custom_call.1} parent=5 // pred_region
        %s2599 = ssub.s32 %s23, 2
        // Predicated region
        $region93: #{tpu_custom_call.1} parent=91 // pred_check
          %p2600 = pneg %p408
        $region94: #{tpu_custom_call.1} parent=91 // pred_check_branch
          %2602 = sbr.rel (%p2600) target = $region96
        $region95: #{tpu_custom_call.1} parent=91 // pred_region
          %s2603 = sand.u32 %s393, 1
          %s2604 = scalar_lea.sflag [#allocation4], %s2603
          %s2605 = sand.u32 %s393, 1
          %s2606 = scalar_lea.vmem [#allocation3], %s2605
          %2607 = dma.done %s2604, 16
        $region96: #{tpu_custom_call.1} parent=91 // pred_fallthru
          _
      $region92: #{tpu_custom_call.1} parent=5 // pred_fallthru
        _
    $region6: #{tpu_custom_call.1} parent=1 // loop_footer
      %s27 = sadd.s32 1, %s23
    $region7: #{tpu_custom_call.1} parent=1 // loop_footer_branch
      %22 = sbr.rel target = $region3
    $region8: #{tpu_custom_call.1} parent=1 // loop_exit
      _
    %2608 = vsyncpa [#allocation4], 1
    %s2609 = scalar_lea.sflag [#allocation4], 1
    %2610 = vsyncpa %s2609, 1

</llo_original>
